<compile_context>
chip_gen: v7x
topology: tpu7x:2x2x1
jax: 0.10.0
libtpu: 0.0.40
codegen_flags: <defaults>
</compile_context>

<pallas_src>
import math
import functools

import jax
import jax.numpy as jnp
import numpy as np
from jax.experimental import pallas as pl
from jax.experimental.pallas import tpu as pltpu


# ----------------------------------------------------------------------------
# Kernel
# ----------------------------------------------------------------------------
def encoder_layer_kernel(*refs, num_heads, head_dim, eps, bias_per_batch,
                         has_bias, has_kpad, bt, T):
    it = iter(refs)
    x_ref = next(it)
    bias_ref = next(it) if has_bias else None
    kpad_ref = next(it) if has_kpad else None
    wqkv_ref = next(it)
    bqkv_ref = next(it)
    wo_ref = next(it)
    bo_ref = next(it)
    ln1_g_ref = next(it)
    ln1_b_ref = next(it)
    w1_ref = next(it)
    b1_ref = next(it)
    w2_ref = next(it)
    b2_ref = next(it)
    ln2_g_ref = next(it)
    ln2_b_ref = next(it)
    out_ref = next(it)
    qkv_ref = next(it)    # VMEM scratch (bt*T, 3C) bf16
    attn_ref = next(it)   # VMEM scratch (bt*T, C)  f32

    C = x_ref.shape[-1]
    rows = bt * T

    x2d = x_ref[...].reshape(rows, C)                      # leading-dim merge

    # Fused QKV projection (bf16 operands on the MXU, f32 accumulation).
    # The 1/sqrt(head_dim) scale is already folded into the q columns / bias.
    qkv = jnp.dot(x2d.astype(jnp.bfloat16), wqkv_ref[...],
                  preferred_element_type=jnp.float32) + bqkv_ref[0]
    qkv_ref[...] = qkv.astype(jnp.bfloat16)

    def attend_one_batch(b):
        # Dynamic sublane offset into the (bt*T, *) slabs.
        if isinstance(b, int):
            r0 = b * T
        else:
            r0 = pl.multiple_of(b * T, 8)
        q_b = qkv_ref[pl.ds(r0, T), 0:C]                   # (T, C) bf16
        k_b = qkv_ref[pl.ds(r0, T), C:2 * C]
        v_b = qkv_ref[pl.ds(r0, T), 2 * C:3 * C]
        if has_kpad:
            kpad_b = kpad_ref[b]                           # (1, T) f32, bcast rows

        # TODO(synk): for 256-wide MXUs (v6e/v7x) with Dh < 128, pad/pack heads
        # so each score matmul fills the array; per-head matmuls underfill it.
        for h in range(num_heads):                         # static -> unrolled
            lo = h * head_dim
            hi = lo + head_dim
            # scores: q @ k^T expressed directly via dot_general (no transpose)
            s = jax.lax.dot_general(q_b[:, lo:hi], k_b[:, lo:hi],
                                    (((1,), (1,)), ((), ())),
                                    preferred_element_type=jnp.float32)  # (T, T)
            if has_bias:
                bidx = b if bias_per_batch else 0
                s = s + bias_ref[bidx, h].astype(jnp.float32)
            if has_kpad:
                s = s + kpad_b
            s = s - jnp.max(s, axis=-1, keepdims=True)
            p = jnp.exp(s)
            p = p * pl.reciprocal(jnp.sum(p, axis=-1, keepdims=True),
                                  approx=True)             # EUP, off the VALU
            o_h = jnp.dot(p.astype(jnp.bfloat16), v_b[:, lo:hi],
                          preferred_element_type=jnp.float32)            # (T, Dh)
            # Write per-head output into the (rows, C) scratch; Wo is applied
            # once, after the head loop (single K=C MXU contraction).
            attn_ref[pl.ds(r0, T), lo:hi] = o_h

    if bt == 1:
        attend_one_batch(0)
    else:
        def body(b, carry):
            attend_one_batch(b)
            return carry
        jax.lax.fori_loop(0, bt, body, 0)

    # Single fused output projection over the whole batch tile.
    y2d = jnp.dot(attn_ref[...].astype(jnp.bfloat16), wo_ref[...],
                  preferred_element_type=jnp.float32) + bo_ref[0]

    # NOTE: dropout / attention-dropout / activation-dropout are identity (eval).
    # Residual + LayerNorm 1 (post-layernorm), f32 on the VPU.
    x1 = x2d + y2d
    mu1 = jnp.mean(x1, axis=-1, keepdims=True)
    var1 = jnp.mean(jnp.square(x1 - mu1), axis=-1, keepdims=True)
    xn = (x1 - mu1) * jax.lax.rsqrt(var1 + eps) * ln1_g_ref[0] + ln1_b_ref[0]

    # FFN (relu) + residual + final LayerNorm.
    h1 = jnp.dot(xn.astype(jnp.bfloat16), w1_ref[...],
                 preferred_element_type=jnp.float32) + b1_ref[0]
    h1 = jnp.maximum(h1, 0.0)
    h2 = jnp.dot(h1.astype(jnp.bfloat16), w2_ref[...],
                 preferred_element_type=jnp.float32) + b2_ref[0]
    x2 = xn + h2
    mu2 = jnp.mean(x2, axis=-1, keepdims=True)
    var2 = jnp.mean(jnp.square(x2 - mu2), axis=-1, keepdims=True)
    out = (x2 - mu2) * jax.lax.rsqrt(var2 + eps) * ln2_g_ref[0] + ln2_b_ref[0]
    out_ref[...] = out.reshape(bt, T, C)


# ----------------------------------------------------------------------------
# VMEM-aware tiling helpers
# ----------------------------------------------------------------------------
def _vmem_budget_bytes():
    """Generation-aware VMEM budget (~85% of per-core capacity)."""
    cap = 64 * 1024 * 1024            # conservative fallback = v7x per-TC VMEM
    try:
        info = pltpu.get_tpu_info()
        cap_attr = getattr(info, "vmem_capacity_bytes", None)
        if cap_attr:
            cap = int(cap_attr)
    except Exception:
        pass
    return int(cap * 0.85)


def _tile_vmem_bytes(bt, T, C, H, F, bias_per_batch, has_bias, has_kpad):
    rows = bt * T
    x_t = rows * C * 4
    out_t = rows * C * 4
    bias_t = ((bt if bias_per_batch else 1) * H * T * T * 2) if has_bias else 0
    kpad_t = (bt * T * 4) if has_kpad else 0
    qkv_s = rows * 3 * C * 2          # bf16 scratch
    attn_s = rows * C * 4             # f32 scratch
    ffn_live = rows * F * 4           # fc1 activation live in VMEM/vregs
    # pipelined tiles are double-buffered; scratch is single-copy.
    return 2 * (x_t + out_t + bias_t + kpad_t) + qkv_s + attn_s + ffn_live


def _pick_batch_tile(B, T, C, H, F, bias_per_batch, has_bias, has_kpad,
                     weight_bytes, vmem_budget, target_rows=512):
    bt = max(1, min(B, max(1, target_rows // max(T, 1))))
    while B % bt:
        bt -= 1
    while bt > 1 and (weight_bytes +
                      _tile_vmem_bytes(bt, T, C, H, F, bias_per_batch,
                                       has_bias, has_kpad)) > vmem_budget:
        bt -= 1
        while B % bt:
            bt -= 1
    # Keep the grid >= 2 where possible so both v7x TensorCores get work.
    if B >= 2 and B // bt < 2:
        bt = max(1, bt // 2)
        while B % bt:
            bt -= 1
    return bt


# ----------------------------------------------------------------------------
# Public wrapper
# ----------------------------------------------------------------------------
def graphormer_encoder_layer(x_tbc, params, self_attn_bias=None,
                             self_attn_mask=None, self_attn_padding_mask=None,
                             eps=1e-5):
    """x_tbc: (T, B, C) float32. Returns (out (T, B, C), None)."""
    T0, B, C = x_tbc.shape
    H = params["num_heads"]
    Dh = C // H
    scaling = 1.0 / math.sqrt(Dh)

    x = jnp.transpose(x_tbc, (1, 0, 2)).astype(jnp.float32)     # (B, T, C)

    # --- pad T to a multiple of 8 (sublane alignment); padded keys are masked.
    pad_t = (-T0) % 8
    T = T0 + pad_t
    kpad_bool = self_attn_padding_mask
    if pad_t:
        x = jnp.pad(x, ((0, 0), (0, pad_t), (0, 0)))
        base = (jnp.zeros((B, T0), bool) if kpad_bool is None
                else kpad_bool.astype(bool))
        kpad_bool = jnp.pad(base, ((0, 0), (0, pad_t)), constant_values=True)
    has_kpad = kpad_bool is not None

    # --- fuse QKV, fold the 1/sqrt(Dh) scaling into Wq/bq, cast weights to bf16.
    wqkv = jnp.concatenate(
        [params["wq"] * scaling, params["wk"], params["wv"]], axis=1
    ).astype(jnp.bfloat16)                                      # (C, 3C)
    bqkv = jnp.concatenate(
        [params["bq"] * scaling, params["bk"], params["bv"]], axis=1
    ).astype(jnp.float32)                                       # (1, 3C)
    wo = params["wo"].astype(jnp.bfloat16)
    w1 = params["w1"].astype(jnp.bfloat16)
    w2 = params["w2"].astype(jnp.bfloat16)
    bo = params["bo"].astype(jnp.float32)
    b1 = params["b1"].astype(jnp.float32)
    b2 = params["b2"].astype(jnp.float32)
    ln1_g = params["ln1_g"].astype(jnp.float32)
    ln1_b = params["ln1_b"].astype(jnp.float32)
    ln2_g = params["ln2_g"].astype(jnp.float32)
    ln2_b = params["ln2_b"].astype(jnp.float32)
    # TODO(synk): on v7x, optionally store Wqkv/W1/W2 as fp8 with per-channel
    # scales to halve weight VMEM residency and tap the fp8 MXU path.

    # --- attention bias: keep unbroadcast over batch, stream as bf16.
    has_bias = (self_attn_bias is not None) or (self_attn_mask is not None)
    bias = None
    bias_per_batch = False
    if has_bias:
        if self_attn_bias is not None:
            bias = self_attn_bias.astype(jnp.float32)
            if bias.ndim == 3:
                bias = bias[None]
            bias = jnp.broadcast_to(bias, (bias.shape[0], H, T0, T0))
        else:
            bias = jnp.zeros((1, H, T0, T0), jnp.float32)
        if self_attn_mask is not None:
            bias = bias + self_attn_mask.astype(jnp.float32)    # additive (T, T)
        if pad_t:
            bias = jnp.pad(bias, ((0, 0), (0, 0), (0, pad_t), (0, pad_t)))
        bias = bias.astype(jnp.bfloat16)
        bias_per_batch = bias.shape[0] > 1

    # --- key padding mask as a small (B, 1, T) additive f32 bias.
    kpad = None
    if has_kpad:
        kpad = jnp.where(kpad_bool, -1e9, 0.0).astype(jnp.float32)
        kpad = kpad.reshape(B, 1, T)

    weights = [wqkv, bqkv, wo, bo, ln1_g, ln1_b, w1, b1, w2, b2, ln2_g, ln2_b]
    weight_bytes = sum(int(np.prod(w.shape)) * w.dtype.itemsize for w in weights)

    F = w1.shape[1]
    vmem_budget = _vmem_budget_bytes()
    bt = _pick_batch_tile(B, T, C, H, F, bias_per_batch, has_bias, has_kpad,
                          weight_bytes, vmem_budget)
    grid = (B // bt,)

    # --- BlockSpecs -----------------------------------------------------------
    in_specs = [pl.BlockSpec((bt, T, C), lambda i: (i, 0, 0))]   # x (batch tile)
    args = [x]
    if has_bias:
        if bias_per_batch:
            in_specs.append(pl.BlockSpec((bt, H, T, T), lambda i: (i, 0, 0, 0)))
        else:
            in_specs.append(pl.BlockSpec((1, H, T, T), lambda i: (0, 0, 0, 0)))
        args.append(bias)
    if has_kpad:
        in_specs.append(pl.BlockSpec((bt, 1, T), lambda i: (i, 0, 0)))
        args.append(kpad)
    # Whole-array, single-copy VMEM residency for the weights (no pipelining).
    in_specs += [pl.BlockSpec(memory_space=pltpu.MemorySpace.VMEM)
                 for _ in weights]
    args += weights

    kernel = functools.partial(
        encoder_layer_kernel,
        num_heads=H, head_dim=Dh, eps=eps, bias_per_batch=bias_per_batch,
        has_bias=has_bias, has_kpad=has_kpad, bt=bt, T=T)

    # TODO(synk): for very long T, add a query-tile grid axis and stream
    # K/V + bias slices flash-style to bound the (T, T) score matrix and the
    # per-batch bias residency (mandatory on v7x's 64 MiB VMEM for T >~ 512).
    out = pl.pallas_call(
        kernel,
        out_shape=jax.ShapeDtypeStruct((B, T, C), jnp.float32),
        grid=grid,
        in_specs=in_specs,
        out_specs=pl.BlockSpec((bt, T, C), lambda i: (i, 0, 0)),
        scratch_shapes=[pltpu.VMEM((bt * T, 3 * C), jnp.bfloat16),
                        pltpu.VMEM((bt * T, C), jnp.float32)],
        compiler_params=pltpu.CompilerParams(
            dimension_semantics=("parallel",),
            vmem_limit_bytes=int(vmem_budget)),
    )(*args)

    if pad_t:
        out = out[:, :T0, :]
    # TODO(synk): offer bf16 activation I/O (x in / out out) when the caller
    # tolerates it — halves the activation DMA (most valuable on v5e).
    return jnp.transpose(out, (1, 0, 2)), None   # need_weights=False -> None


# ----------------------------------------------------------------------------
# Pure-JAX f32 reference (correctness check)
# ----------------------------------------------------------------------------
def reference_forward(x_tbc, params, bias=None, padding_mask=None, eps=1e-5):
    T, B, C = x_tbc.shape
    H = params["num_heads"]
    Dh = C // H
    x = jnp.transpose(x_tbc, (1, 0, 2))                          # (B, T, C)
    scaling = 1.0 / math.sqrt(Dh)
    q = (x @ params["wq"] + params["bq"][0]) * scaling
    k = x @ params["wk"] + params["bk"][0]
    v = x @ params["wv"] + params["bv"][0]
    qh = q.reshape(B, T, H, Dh).transpose(0, 2, 1, 3)
    kh = k.reshape(B, T, H, Dh).transpose(0, 2, 1, 3)
    vh = v.reshape(B, T, H, Dh).transpose(0, 2, 1, 3)
    s = jnp.einsum("bhtd,bhsd->bhts", qh, kh)
    if bias is not None:
        s = s + bias
    if padding_mask is not None:
        s = s + jnp.where(padding_mask, -1e9, 0.0)[:, None, None, :]
    p = jax.nn.softmax(s, axis=-1)
    o = jnp.einsum("bhts,bhsd->bhtd", p, vh).transpose(0, 2, 1, 3).reshape(B, T, C)
    y = o @ params["wo"] + params["bo"][0]
    x1 = x + y

    def ln(z, g, b):
        mu = jnp.mean(z, -1, keepdims=True)
        var = jnp.mean(jnp.square(z - mu), -1, keepdims=True)
        return (z - mu) * jax.lax.rsqrt(var + eps) * g[0] + b[0]

    xn = ln(x1, params["ln1_g"], params["ln1_b"])
    h1 = jnp.maximum(xn @ params["w1"] + params["b1"][0], 0.0)
    h2 = h1 @ params["w2"] + params["b2"][0]
    x2 = ln(xn + h2, params["ln2_g"], params["ln2_b"])
    return jnp.transpose(x2, (1, 0, 2))


def init_params(key, C, F, H):
    keys = jax.random.split(key, 12)
    s = 0.05
    return {
        "num_heads": H,
        "wq": jax.random.normal(keys[0], (C, C), jnp.float32) * s,
        "wk": jax.random.normal(keys[1], (C, C), jnp.float32) * s,
        "wv": jax.random.normal(keys[2], (C, C), jnp.float32) * s,
        "wo": jax.random.normal(keys[3], (C, C), jnp.float32) * s,
        "bq": jax.random.normal(keys[4], (1, C), jnp.float32) * s,
        "bk": jax.random.normal(keys[5], (1, C), jnp.float32) * s,
        "bv": jax.random.normal(keys[6], (1, C), jnp.float32) * s,
        "bo": jax.random.normal(keys[7], (1, C), jnp.float32) * s,
        "ln1_g": jnp.ones((1, C), jnp.float32),
        "ln1_b": jnp.zeros((1, C), jnp.float32),
        "w1": jax.random.normal(keys[8], (C, F), jnp.float32) * s,
        "b1": jax.random.normal(keys[9], (1, F), jnp.float32) * s,
        "w2": jax.random.normal(keys[10], (F, C), jnp.float32) * s,
        "b2": jax.random.normal(keys[11], (1, C), jnp.float32) * s,
        "ln2_g": jnp.ones((1, C), jnp.float32),
        "ln2_b": jnp.zeros((1, C), jnp.float32),
    }


if __name__ == "__main__":
    # Small synthetic shapes consistent with the module: seq=8, batch=2,
    # embedding_dim=32, ffn_embedding_dim=64, num_attention_heads=4.
    T, B, C, F, H = 8, 2, 32, 64, 4
    key = jax.random.PRNGKey(0)
    kx, kb, kp = jax.random.split(key, 3)

    x = jax.random.normal(kx, (T, B, C), jnp.float32)                  # (T, B, C)
    attn_bias = jax.random.normal(kb, (B, H, T, T), jnp.float32) * 0.1
    params = init_params(kp, C, F, H)

    # TODO(synk): dropout / attention-dropout / activation-dropout are
    # stochastic training-time ops; this kernel implements eval-mode (identity).

    # Run 1: attention bias only. bf16 MXU operands / bf16 bias stream ->
    # compare with a loose tolerance against the pure-f32 reference.
    out, attn = graphormer_encoder_layer(x, params, self_attn_bias=attn_bias)
    out = jax.block_until_ready(out)
    ref = reference_forward(x, params, bias=attn_bias)
    np.testing.assert_allclose(np.asarray(out), np.asarray(ref),
                               rtol=5e-2, atol=5e-2)
    assert out.shape == (T, B, C) and attn is None

    # Run 2: attention bias + key padding mask (last two keys of batch elem 1).
    pad = jnp.zeros((B, T), bool).at[1, -2:].set(True)
    out2, _ = graphormer_encoder_layer(x, params, self_attn_bias=attn_bias,
                                       self_attn_padding_mask=pad)
    out2 = jax.block_until_ready(out2)
    ref2 = reference_forward(x, params, bias=attn_bias, padding_mask=pad)
    np.testing.assert_allclose(np.asarray(out2), np.asarray(ref2),
                               rtol=5e-2, atol=5e-2)

    # Run 3: no bias / no mask — exercises the specialized (has_bias=False,
    # has_kpad=False) kernel that streams no zeros arrays from HBM.
    out3, _ = graphormer_encoder_layer(x, params)
    out3 = jax.block_until_ready(out3)
    ref3 = reference_forward(x, params)
    np.testing.assert_allclose(np.asarray(out3), np.asarray(ref3),
                               rtol=5e-2, atol=5e-2)

    print("KERNEL_OK")
</pallas_src>

<mosaic_0001>
module attributes {stable_mosaic.version = 11 : i64} {
  func.func @encoder_layer_kernel(%arg0: i32, %arg1: memref<1x8x32xf32, #tpu.memory_space<vmem>>, %arg2: memref<1x4x8x8xbf16, #tpu.memory_space<vmem>>, %arg3: memref<32x96xbf16, #tpu.memory_space<vmem>>, %arg4: memref<1x96xf32, #tpu.memory_space<vmem>>, %arg5: memref<32x32xbf16, #tpu.memory_space<vmem>>, %arg6: memref<1x32xf32, #tpu.memory_space<vmem>>, %arg7: memref<1x32xf32, #tpu.memory_space<vmem>>, %arg8: memref<1x32xf32, #tpu.memory_space<vmem>>, %arg9: memref<32x64xbf16, #tpu.memory_space<vmem>>, %arg10: memref<1x64xf32, #tpu.memory_space<vmem>>, %arg11: memref<64x32xbf16, #tpu.memory_space<vmem>>, %arg12: memref<1x32xf32, #tpu.memory_space<vmem>>, %arg13: memref<1x32xf32, #tpu.memory_space<vmem>>, %arg14: memref<1x32xf32, #tpu.memory_space<vmem>>, %arg15: memref<1x8x32xf32, #tpu.memory_space<vmem>>, %arg16: memref<8x96xbf16, #tpu.memory_space<vmem>>, %arg17: memref<8x32xf32, #tpu.memory_space<vmem>>) attributes {dimension_semantics = [#tpu.dimension_semantics<parallel>], iteration_bounds = array<i64: 2>, scalar_prefetch = 0 : i64, scratch_operands = 2 : i64, tpu.core_type = #tpu.core_type<tc>, window_params = [{transform_indices = @transform_0, window_bounds = array<i64: 1, 8, 32>}, {transform_indices = @transform_1, window_bounds = array<i64: 1, 4, 8, 8>}, {pipeline_mode = #tpu.pipeline_mode<synchronous>, transform_indices = @transform_2, window_bounds = array<i64: 32, 96>}, {pipeline_mode = #tpu.pipeline_mode<synchronous>, transform_indices = @transform_3, window_bounds = array<i64: 1, 96>}, {pipeline_mode = #tpu.pipeline_mode<synchronous>, transform_indices = @transform_4, window_bounds = array<i64: 32, 32>}, {pipeline_mode = #tpu.pipeline_mode<synchronous>, transform_indices = @transform_5, window_bounds = array<i64: 1, 32>}, {pipeline_mode = #tpu.pipeline_mode<synchronous>, transform_indices = @transform_6, window_bounds = array<i64: 1, 32>}, {pipeline_mode = #tpu.pipeline_mode<synchronous>, transform_indices = @transform_7, window_bounds = array<i64: 1, 32>}, {pipeline_mode = #tpu.pipeline_mode<synchronous>, transform_indices = @transform_8, window_bounds = array<i64: 32, 64>}, {pipeline_mode = #tpu.pipeline_mode<synchronous>, transform_indices = @transform_9, window_bounds = array<i64: 1, 64>}, {pipeline_mode = #tpu.pipeline_mode<synchronous>, transform_indices = @transform_10, window_bounds = array<i64: 64, 32>}, {pipeline_mode = #tpu.pipeline_mode<synchronous>, transform_indices = @transform_11, window_bounds = array<i64: 1, 32>}, {pipeline_mode = #tpu.pipeline_mode<synchronous>, transform_indices = @transform_12, window_bounds = array<i64: 1, 32>}, {pipeline_mode = #tpu.pipeline_mode<synchronous>, transform_indices = @transform_13, window_bounds = array<i64: 1, 32>}, {transform_indices = @transform_14, window_bounds = array<i64: 1, 8, 32>}]} {
    %c0 = arith.constant 0 : index
    %c0_0 = arith.constant 0 : index
    %c0_1 = arith.constant 0 : index
    %0 = vector.load %arg1[%c0, %c0_0, %c0_1] : memref<1x8x32xf32, #tpu.memory_space<vmem>>, vector<1x8x32xf32>
    %1 = vector.shape_cast %0 : vector<1x8x32xf32> to vector<8x32xf32>
    %2 = arith.truncf %1 : vector<8x32xf32> to vector<8x32xbf16>
    %c0_2 = arith.constant 0 : index
    %c0_3 = arith.constant 0 : index
    %3 = vector.load %arg3[%c0_2, %c0_3] : memref<32x96xbf16, #tpu.memory_space<vmem>>, vector<32x96xbf16>
    %cst = arith.constant dense<0.000000e+00> : vector<8x96xf32>
    %4 = tpu.matmul %2, %3, %cst {dimension_numbers = #tpu.dot_dimension_numbers<[1], [0], [0], [1], [0, 0, 1, 1], [], []>} : vector<8x32xbf16>, vector<32x96xbf16>, vector<8x96xf32> -> vector<8x96xf32>
    %c0_4 = arith.constant 0 : index
    %c0_5 = arith.constant 0 : index
    %5 = vector.load %arg4[%c0_4, %c0_5] : memref<1x96xf32, #tpu.memory_space<vmem>>, vector<1x96xf32>
    %6 = vector.shape_cast %5 : vector<1x96xf32> to vector<96xf32>
    %7 = vector.shape_cast %6 : vector<96xf32> to vector<1x96xf32>
    %8 = vector.broadcast %7 : vector<1x96xf32> to vector<8x96xf32>
    %9 = arith.addf %4, %8 : vector<8x96xf32>
    %10 = arith.truncf %9 : vector<8x96xf32> to vector<8x96xbf16>
    %c0_6 = arith.constant 0 : index
    %c0_7 = arith.constant 0 : index
    %11 = vector.load %arg16[%c0_6, %c0_7] : memref<8x96xbf16, #tpu.memory_space<vmem>>, vector<8x96xbf16>
    tpu.vector_store %arg16[%c0_6, %c0_7], %10 {strides = array<i32>} : memref<8x96xbf16, #tpu.memory_space<vmem>>, vector<8x96xbf16>,
    %c0_8 = arith.constant 0 : index
    %c0_9 = arith.constant 0 : index
    %12 = vector.load %arg16[%c0_8, %c0_9] : memref<8x96xbf16, #tpu.memory_space<vmem>>, vector<8x32xbf16>
    %c0_10 = arith.constant 0 : index
    %c32 = arith.constant 32 : index
    %13 = vector.load %arg16[%c0_10, %c32] : memref<8x96xbf16, #tpu.memory_space<vmem>>, vector<8x32xbf16>
    %c0_11 = arith.constant 0 : index
    %c64 = arith.constant 64 : index
    %14 = vector.load %arg16[%c0_11, %c64] : memref<8x96xbf16, #tpu.memory_space<vmem>>, vector<8x32xbf16>
    %15 = vector.extract_strided_slice %12 {offsets = [0, 0], sizes = [8, 8], strides = [1, 1]} : vector<8x32xbf16> to vector<8x8xbf16>
    %16 = vector.extract_strided_slice %13 {offsets = [0, 0], sizes = [8, 8], strides = [1, 1]} : vector<8x32xbf16> to vector<8x8xbf16>
    %cst_12 = arith.constant dense<0.000000e+00> : vector<8x8xf32>
    %17 = tpu.matmul %15, %16, %cst_12 {dimension_numbers = #tpu.dot_dimension_numbers<[1], [1], [0], [0], [0, 0, 1, 0], [], []>} : vector<8x8xbf16>, vector<8x8xbf16>, vector<8x8xf32> -> vector<8x8xf32>
    %c0_13 = arith.constant 0 : index
    %c0_14 = arith.constant 0 : index
    %c0_15 = arith.constant 0 : index
    %c0_16 = arith.constant 0 : index
    %18 = vector.load %arg2[%c0_13, %c0_14, %c0_15, %c0_16] : memref<1x4x8x8xbf16, #tpu.memory_space<vmem>>, vector<1x1x8x8xbf16>
    %19 = vector.shape_cast %18 : vector<1x1x8x8xbf16> to vector<8x8xbf16>
    %20 = arith.extf %19 : vector<8x8xbf16> to vector<8x8xf32>
    %21 = arith.addf %17, %20 : vector<8x8xf32>
    %cst_17 = arith.constant dense<0xFF800000> : vector<8xf32>
    %22 = vector.multi_reduction <maximumf>, %21, %cst_17 [1] : vector<8x8xf32> to vector<8xf32>
    %23 = vector.shape_cast %22 : vector<8xf32> to vector<8x1xf32>
    %24 = vector.broadcast %23 : vector<8x1xf32> to vector<8x8xf32>
    %25 = arith.subf %21, %24 : vector<8x8xf32>
    %26 = math.exp %25 : vector<8x8xf32>
    %cst_18 = arith.constant dense<0.000000e+00> : vector<8xf32>
    %27 = vector.multi_reduction <add>, %26, %cst_18 [1] : vector<8x8xf32> to vector<8xf32>
    %28 = vector.shape_cast %27 : vector<8xf32> to vector<8x1xf32>
    %29 = tpu.reciprocal %28 {approx = true} : vector<8x1xf32> -> vector<8x1xf32>
    %30 = vector.broadcast %29 : vector<8x1xf32> to vector<8x8xf32>
    %31 = arith.mulf %26, %30 : vector<8x8xf32>
    %32 = arith.truncf %31 : vector<8x8xf32> to vector<8x8xbf16>
    %33 = vector.extract_strided_slice %14 {offsets = [0, 0], sizes = [8, 8], strides = [1, 1]} : vector<8x32xbf16> to vector<8x8xbf16>
    %cst_19 = arith.constant dense<0.000000e+00> : vector<8x8xf32>
    %34 = tpu.matmul %32, %33, %cst_19 {dimension_numbers = #tpu.dot_dimension_numbers<[1], [0], [0], [1], [0, 0, 1, 1], [], []>} : vector<8x8xbf16>, vector<8x8xbf16>, vector<8x8xf32> -> vector<8x8xf32>
    %c0_20 = arith.constant 0 : index
    %c0_21 = arith.constant 0 : index
    %35 = vector.load %arg17[%c0_20, %c0_21] : memref<8x32xf32, #tpu.memory_space<vmem>>, vector<8x8xf32>
    tpu.vector_store %arg17[%c0_20, %c0_21], %34 {strides = array<i32>} : memref<8x32xf32, #tpu.memory_space<vmem>>, vector<8x8xf32>,
    %36 = vector.extract_strided_slice %12 {offsets = [0, 8], sizes = [8, 8], strides = [1, 1]} : vector<8x32xbf16> to vector<8x8xbf16>
    %37 = vector.extract_strided_slice %13 {offsets = [0, 8], sizes = [8, 8], strides = [1, 1]} : vector<8x32xbf16> to vector<8x8xbf16>
    %cst_22 = arith.constant dense<0.000000e+00> : vector<8x8xf32>
    %38 = tpu.matmul %36, %37, %cst_22 {dimension_numbers = #tpu.dot_dimension_numbers<[1], [1], [0], [0], [0, 0, 1, 0], [], []>} : vector<8x8xbf16>, vector<8x8xbf16>, vector<8x8xf32> -> vector<8x8xf32>
    %c0_23 = arith.constant 0 : index
    %c1 = arith.constant 1 : index
    %c0_24 = arith.constant 0 : index
    %c0_25 = arith.constant 0 : index
    %39 = vector.load %arg2[%c0_23, %c1, %c0_24, %c0_25] : memref<1x4x8x8xbf16, #tpu.memory_space<vmem>>, vector<1x1x8x8xbf16>
    %40 = vector.shape_cast %39 : vector<1x1x8x8xbf16> to vector<8x8xbf16>
    %41 = arith.extf %40 : vector<8x8xbf16> to vector<8x8xf32>
    %42 = arith.addf %38, %41 : vector<8x8xf32>
    %cst_26 = arith.constant dense<0xFF800000> : vector<8xf32>
    %43 = vector.multi_reduction <maximumf>, %42, %cst_26 [1] : vector<8x8xf32> to vector<8xf32>
    %44 = vector.shape_cast %43 : vector<8xf32> to vector<8x1xf32>
    %45 = vector.broadcast %44 : vector<8x1xf32> to vector<8x8xf32>
    %46 = arith.subf %42, %45 : vector<8x8xf32>
    %47 = math.exp %46 : vector<8x8xf32>
    %cst_27 = arith.constant dense<0.000000e+00> : vector<8xf32>
    %48 = vector.multi_reduction <add>, %47, %cst_27 [1] : vector<8x8xf32> to vector<8xf32>
    %49 = vector.shape_cast %48 : vector<8xf32> to vector<8x1xf32>
    %50 = tpu.reciprocal %49 {approx = true} : vector<8x1xf32> -> vector<8x1xf32>
    %51 = vector.broadcast %50 : vector<8x1xf32> to vector<8x8xf32>
    %52 = arith.mulf %47, %51 : vector<8x8xf32>
    %53 = arith.truncf %52 : vector<8x8xf32> to vector<8x8xbf16>
    %54 = vector.extract_strided_slice %14 {offsets = [0, 8], sizes = [8, 8], strides = [1, 1]} : vector<8x32xbf16> to vector<8x8xbf16>
    %cst_28 = arith.constant dense<0.000000e+00> : vector<8x8xf32>
    %55 = tpu.matmul %53, %54, %cst_28 {dimension_numbers = #tpu.dot_dimension_numbers<[1], [0], [0], [1], [0, 0, 1, 1], [], []>} : vector<8x8xbf16>, vector<8x8xbf16>, vector<8x8xf32> -> vector<8x8xf32>
    %c0_29 = arith.constant 0 : index
    %c8 = arith.constant 8 : index
    %56 = vector.load %arg17[%c0_29, %c8] : memref<8x32xf32, #tpu.memory_space<vmem>>, vector<8x8xf32>
    tpu.vector_store %arg17[%c0_29, %c8], %55 {strides = array<i32>} : memref<8x32xf32, #tpu.memory_space<vmem>>, vector<8x8xf32>,
    %57 = vector.extract_strided_slice %12 {offsets = [0, 16], sizes = [8, 8], strides = [1, 1]} : vector<8x32xbf16> to vector<8x8xbf16>
    %58 = vector.extract_strided_slice %13 {offsets = [0, 16], sizes = [8, 8], strides = [1, 1]} : vector<8x32xbf16> to vector<8x8xbf16>
    %cst_30 = arith.constant dense<0.000000e+00> : vector<8x8xf32>
    %59 = tpu.matmul %57, %58, %cst_30 {dimension_numbers = #tpu.dot_dimension_numbers<[1], [1], [0], [0], [0, 0, 1, 0], [], []>} : vector<8x8xbf16>, vector<8x8xbf16>, vector<8x8xf32> -> vector<8x8xf32>
    %c0_31 = arith.constant 0 : index
    %c2 = arith.constant 2 : index
    %c0_32 = arith.constant 0 : index
    %c0_33 = arith.constant 0 : index
    %60 = vector.load %arg2[%c0_31, %c2, %c0_32, %c0_33] : memref<1x4x8x8xbf16, #tpu.memory_space<vmem>>, vector<1x1x8x8xbf16>
    %61 = vector.shape_cast %60 : vector<1x1x8x8xbf16> to vector<8x8xbf16>
    %62 = arith.extf %61 : vector<8x8xbf16> to vector<8x8xf32>
    %63 = arith.addf %59, %62 : vector<8x8xf32>
    %cst_34 = arith.constant dense<0xFF800000> : vector<8xf32>
    %64 = vector.multi_reduction <maximumf>, %63, %cst_34 [1] : vector<8x8xf32> to vector<8xf32>
    %65 = vector.shape_cast %64 : vector<8xf32> to vector<8x1xf32>
    %66 = vector.broadcast %65 : vector<8x1xf32> to vector<8x8xf32>
    %67 = arith.subf %63, %66 : vector<8x8xf32>
    %68 = math.exp %67 : vector<8x8xf32>
    %cst_35 = arith.constant dense<0.000000e+00> : vector<8xf32>
    %69 = vector.multi_reduction <add>, %68, %cst_35 [1] : vector<8x8xf32> to vector<8xf32>
    %70 = vector.shape_cast %69 : vector<8xf32> to vector<8x1xf32>
    %71 = tpu.reciprocal %70 {approx = true} : vector<8x1xf32> -> vector<8x1xf32>
    %72 = vector.broadcast %71 : vector<8x1xf32> to vector<8x8xf32>
    %73 = arith.mulf %68, %72 : vector<8x8xf32>
    %74 = arith.truncf %73 : vector<8x8xf32> to vector<8x8xbf16>
    %75 = vector.extract_strided_slice %14 {offsets = [0, 16], sizes = [8, 8], strides = [1, 1]} : vector<8x32xbf16> to vector<8x8xbf16>
    %cst_36 = arith.constant dense<0.000000e+00> : vector<8x8xf32>
    %76 = tpu.matmul %74, %75, %cst_36 {dimension_numbers = #tpu.dot_dimension_numbers<[1], [0], [0], [1], [0, 0, 1, 1], [], []>} : vector<8x8xbf16>, vector<8x8xbf16>, vector<8x8xf32> -> vector<8x8xf32>
    %c0_37 = arith.constant 0 : index
    %c16 = arith.constant 16 : index
    %77 = vector.load %arg17[%c0_37, %c16] : memref<8x32xf32, #tpu.memory_space<vmem>>, vector<8x8xf32>
    tpu.vector_store %arg17[%c0_37, %c16], %76 {strides = array<i32>} : memref<8x32xf32, #tpu.memory_space<vmem>>, vector<8x8xf32>,
    %78 = vector.extract_strided_slice %12 {offsets = [0, 24], sizes = [8, 8], strides = [1, 1]} : vector<8x32xbf16> to vector<8x8xbf16>
    %79 = vector.extract_strided_slice %13 {offsets = [0, 24], sizes = [8, 8], strides = [1, 1]} : vector<8x32xbf16> to vector<8x8xbf16>
    %cst_38 = arith.constant dense<0.000000e+00> : vector<8x8xf32>
    %80 = tpu.matmul %78, %79, %cst_38 {dimension_numbers = #tpu.dot_dimension_numbers<[1], [1], [0], [0], [0, 0, 1, 0], [], []>} : vector<8x8xbf16>, vector<8x8xbf16>, vector<8x8xf32> -> vector<8x8xf32>
    %c0_39 = arith.constant 0 : index
    %c3 = arith.constant 3 : index
    %c0_40 = arith.constant 0 : index
    %c0_41 = arith.constant 0 : index
    %81 = vector.load %arg2[%c0_39, %c3, %c0_40, %c0_41] : memref<1x4x8x8xbf16, #tpu.memory_space<vmem>>, vector<1x1x8x8xbf16>
    %82 = vector.shape_cast %81 : vector<1x1x8x8xbf16> to vector<8x8xbf16>
    %83 = arith.extf %82 : vector<8x8xbf16> to vector<8x8xf32>
    %84 = arith.addf %80, %83 : vector<8x8xf32>
    %cst_42 = arith.constant dense<0xFF800000> : vector<8xf32>
    %85 = vector.multi_reduction <maximumf>, %84, %cst_42 [1] : vector<8x8xf32> to vector<8xf32>
    %86 = vector.shape_cast %85 : vector<8xf32> to vector<8x1xf32>
    %87 = vector.broadcast %86 : vector<8x1xf32> to vector<8x8xf32>
    %88 = arith.subf %84, %87 : vector<8x8xf32>
    %89 = math.exp %88 : vector<8x8xf32>
    %cst_43 = arith.constant dense<0.000000e+00> : vector<8xf32>
    %90 = vector.multi_reduction <add>, %89, %cst_43 [1] : vector<8x8xf32> to vector<8xf32>
    %91 = vector.shape_cast %90 : vector<8xf32> to vector<8x1xf32>
    %92 = tpu.reciprocal %91 {approx = true} : vector<8x1xf32> -> vector<8x1xf32>
    %93 = vector.broadcast %92 : vector<8x1xf32> to vector<8x8xf32>
    %94 = arith.mulf %89, %93 : vector<8x8xf32>
    %95 = arith.truncf %94 : vector<8x8xf32> to vector<8x8xbf16>
    %96 = vector.extract_strided_slice %14 {offsets = [0, 24], sizes = [8, 8], strides = [1, 1]} : vector<8x32xbf16> to vector<8x8xbf16>
    %cst_44 = arith.constant dense<0.000000e+00> : vector<8x8xf32>
    %97 = tpu.matmul %95, %96, %cst_44 {dimension_numbers = #tpu.dot_dimension_numbers<[1], [0], [0], [1], [0, 0, 1, 1], [], []>} : vector<8x8xbf16>, vector<8x8xbf16>, vector<8x8xf32> -> vector<8x8xf32>
    %c0_45 = arith.constant 0 : index
    %c24 = arith.constant 24 : index
    %98 = vector.load %arg17[%c0_45, %c24] : memref<8x32xf32, #tpu.memory_space<vmem>>, vector<8x8xf32>
    tpu.vector_store %arg17[%c0_45, %c24], %97 {strides = array<i32>} : memref<8x32xf32, #tpu.memory_space<vmem>>, vector<8x8xf32>,
    %c0_46 = arith.constant 0 : index
    %c0_47 = arith.constant 0 : index
    %99 = vector.load %arg17[%c0_46, %c0_47] : memref<8x32xf32, #tpu.memory_space<vmem>>, vector<8x32xf32>
    %100 = arith.truncf %99 : vector<8x32xf32> to vector<8x32xbf16>
    %c0_48 = arith.constant 0 : index
    %c0_49 = arith.constant 0 : index
    %101 = vector.load %arg5[%c0_48, %c0_49] : memref<32x32xbf16, #tpu.memory_space<vmem>>, vector<32x32xbf16>
    %cst_50 = arith.constant dense<0.000000e+00> : vector<8x32xf32>
    %102 = tpu.matmul %100, %101, %cst_50 {dimension_numbers = #tpu.dot_dimension_numbers<[1], [0], [0], [1], [0, 0, 1, 1], [], []>} : vector<8x32xbf16>, vector<32x32xbf16>, vector<8x32xf32> -> vector<8x32xf32>
    %c0_51 = arith.constant 0 : index
    %c0_52 = arith.constant 0 : index
    %103 = vector.load %arg6[%c0_51, %c0_52] : memref<1x32xf32, #tpu.memory_space<vmem>>, vector<1x32xf32>
    %104 = vector.shape_cast %103 : vector<1x32xf32> to vector<32xf32>
    %105 = vector.shape_cast %104 : vector<32xf32> to vector<1x32xf32>
    %106 = vector.broadcast %105 : vector<1x32xf32> to vector<8x32xf32>
    %107 = arith.addf %102, %106 : vector<8x32xf32>
    %108 = arith.addf %1, %107 : vector<8x32xf32>
    %cst_53 = arith.constant dense<0.000000e+00> : vector<8xf32>
    %109 = vector.multi_reduction <add>, %108, %cst_53 [1] : vector<8x32xf32> to vector<8xf32>
    %110 = vector.shape_cast %109 : vector<8xf32> to vector<8x1xf32>
    %cst_54 = arith.constant 3.200000e+01 : f32
    %111 = vector.broadcast %cst_54 : f32 to vector<8x1xf32>
    %112 = arith.divf %110, %111 : vector<8x1xf32>
    %113 = vector.broadcast %112 : vector<8x1xf32> to vector<8x32xf32>
    %114 = arith.subf %108, %113 : vector<8x32xf32>
    %115 = arith.mulf %114, %114 : vector<8x32xf32>
    %cst_55 = arith.constant dense<0.000000e+00> : vector<8xf32>
    %116 = vector.multi_reduction <add>, %115, %cst_55 [1] : vector<8x32xf32> to vector<8xf32>
    %117 = vector.shape_cast %116 : vector<8xf32> to vector<8x1xf32>
    %cst_56 = arith.constant 3.200000e+01 : f32
    %118 = vector.broadcast %cst_56 : f32 to vector<8x1xf32>
    %119 = arith.divf %117, %118 : vector<8x1xf32>
    %120 = vector.broadcast %112 : vector<8x1xf32> to vector<8x32xf32>
    %121 = arith.subf %108, %120 : vector<8x32xf32>
    %cst_57 = arith.constant 9.99999974E-6 : f32
    %122 = vector.broadcast %cst_57 : f32 to vector<8x1xf32>
    %123 = arith.addf %119, %122 : vector<8x1xf32>
    %124 = math.rsqrt %123 : vector<8x1xf32>
    %125 = vector.broadcast %124 : vector<8x1xf32> to vector<8x32xf32>
    %126 = arith.mulf %121, %125 : vector<8x32xf32>
    %c0_58 = arith.constant 0 : index
    %c0_59 = arith.constant 0 : index
    %127 = vector.load %arg7[%c0_58, %c0_59] : memref<1x32xf32, #tpu.memory_space<vmem>>, vector<1x32xf32>
    %128 = vector.shape_cast %127 : vector<1x32xf32> to vector<32xf32>
    %129 = vector.shape_cast %128 : vector<32xf32> to vector<1x32xf32>
    %130 = vector.broadcast %129 : vector<1x32xf32> to vector<8x32xf32>
    %131 = arith.mulf %126, %130 : vector<8x32xf32>
    %c0_60 = arith.constant 0 : index
    %c0_61 = arith.constant 0 : index
    %132 = vector.load %arg8[%c0_60, %c0_61] : memref<1x32xf32, #tpu.memory_space<vmem>>, vector<1x32xf32>
    %133 = vector.shape_cast %132 : vector<1x32xf32> to vector<32xf32>
    %134 = vector.shape_cast %133 : vector<32xf32> to vector<1x32xf32>
    %135 = vector.broadcast %134 : vector<1x32xf32> to vector<8x32xf32>
    %136 = arith.addf %131, %135 : vector<8x32xf32>
    %137 = arith.truncf %136 : vector<8x32xf32> to vector<8x32xbf16>
    %c0_62 = arith.constant 0 : index
    %c0_63 = arith.constant 0 : index
    %138 = vector.load %arg9[%c0_62, %c0_63] : memref<32x64xbf16, #tpu.memory_space<vmem>>, vector<32x64xbf16>
    %cst_64 = arith.constant dense<0.000000e+00> : vector<8x64xf32>
    %139 = tpu.matmul %137, %138, %cst_64 {dimension_numbers = #tpu.dot_dimension_numbers<[1], [0], [0], [1], [0, 0, 1, 1], [], []>} : vector<8x32xbf16>, vector<32x64xbf16>, vector<8x64xf32> -> vector<8x64xf32>
    %c0_65 = arith.constant 0 : index
    %c0_66 = arith.constant 0 : index
    %140 = vector.load %arg10[%c0_65, %c0_66] : memref<1x64xf32, #tpu.memory_space<vmem>>, vector<1x64xf32>
    %141 = vector.shape_cast %140 : vector<1x64xf32> to vector<64xf32>
    %142 = vector.shape_cast %141 : vector<64xf32> to vector<1x64xf32>
    %143 = vector.broadcast %142 : vector<1x64xf32> to vector<8x64xf32>
    %144 = arith.addf %139, %143 : vector<8x64xf32>
    %cst_67 = arith.constant 0.000000e+00 : f32
    %145 = vector.broadcast %cst_67 : f32 to vector<8x64xf32>
    %146 = arith.maximumf %144, %145 : vector<8x64xf32>
    %147 = arith.truncf %146 : vector<8x64xf32> to vector<8x64xbf16>
    %c0_68 = arith.constant 0 : index
    %c0_69 = arith.constant 0 : index
    %148 = vector.load %arg11[%c0_68, %c0_69] : memref<64x32xbf16, #tpu.memory_space<vmem>>, vector<64x32xbf16>
    %cst_70 = arith.constant dense<0.000000e+00> : vector<8x32xf32>
    %149 = tpu.matmul %147, %148, %cst_70 {dimension_numbers = #tpu.dot_dimension_numbers<[1], [0], [0], [1], [0, 0, 1, 1], [], []>} : vector<8x64xbf16>, vector<64x32xbf16>, vector<8x32xf32> -> vector<8x32xf32>
    %c0_71 = arith.constant 0 : index
    %c0_72 = arith.constant 0 : index
    %150 = vector.load %arg12[%c0_71, %c0_72] : memref<1x32xf32, #tpu.memory_space<vmem>>, vector<1x32xf32>
    %151 = vector.shape_cast %150 : vector<1x32xf32> to vector<32xf32>
    %152 = vector.shape_cast %151 : vector<32xf32> to vector<1x32xf32>
    %153 = vector.broadcast %152 : vector<1x32xf32> to vector<8x32xf32>
    %154 = arith.addf %149, %153 : vector<8x32xf32>
    %155 = arith.addf %136, %154 : vector<8x32xf32>
    %cst_73 = arith.constant dense<0.000000e+00> : vector<8xf32>
    %156 = vector.multi_reduction <add>, %155, %cst_73 [1] : vector<8x32xf32> to vector<8xf32>
    %157 = vector.shape_cast %156 : vector<8xf32> to vector<8x1xf32>
    %cst_74 = arith.constant 3.200000e+01 : f32
    %158 = vector.broadcast %cst_74 : f32 to vector<8x1xf32>
    %159 = arith.divf %157, %158 : vector<8x1xf32>
    %160 = vector.broadcast %159 : vector<8x1xf32> to vector<8x32xf32>
    %161 = arith.subf %155, %160 : vector<8x32xf32>
    %162 = arith.mulf %161, %161 : vector<8x32xf32>
    %cst_75 = arith.constant dense<0.000000e+00> : vector<8xf32>
    %163 = vector.multi_reduction <add>, %162, %cst_75 [1] : vector<8x32xf32> to vector<8xf32>
    %164 = vector.shape_cast %163 : vector<8xf32> to vector<8x1xf32>
    %cst_76 = arith.constant 3.200000e+01 : f32
    %165 = vector.broadcast %cst_76 : f32 to vector<8x1xf32>
    %166 = arith.divf %164, %165 : vector<8x1xf32>
    %167 = vector.broadcast %159 : vector<8x1xf32> to vector<8x32xf32>
    %168 = arith.subf %155, %167 : vector<8x32xf32>
    %cst_77 = arith.constant 9.99999974E-6 : f32
    %169 = vector.broadcast %cst_77 : f32 to vector<8x1xf32>
    %170 = arith.addf %166, %169 : vector<8x1xf32>
    %171 = math.rsqrt %170 : vector<8x1xf32>
    %172 = vector.broadcast %171 : vector<8x1xf32> to vector<8x32xf32>
    %173 = arith.mulf %168, %172 : vector<8x32xf32>
    %c0_78 = arith.constant 0 : index
    %c0_79 = arith.constant 0 : index
    %174 = vector.load %arg13[%c0_78, %c0_79] : memref<1x32xf32, #tpu.memory_space<vmem>>, vector<1x32xf32>
    %175 = vector.shape_cast %174 : vector<1x32xf32> to vector<32xf32>
    %176 = vector.shape_cast %175 : vector<32xf32> to vector<1x32xf32>
    %177 = vector.broadcast %176 : vector<1x32xf32> to vector<8x32xf32>
    %178 = arith.mulf %173, %177 : vector<8x32xf32>
    %c0_80 = arith.constant 0 : index
    %c0_81 = arith.constant 0 : index
    %179 = vector.load %arg14[%c0_80, %c0_81] : memref<1x32xf32, #tpu.memory_space<vmem>>, vector<1x32xf32>
    %180 = vector.shape_cast %179 : vector<1x32xf32> to vector<32xf32>
    %181 = vector.shape_cast %180 : vector<32xf32> to vector<1x32xf32>
    %182 = vector.broadcast %181 : vector<1x32xf32> to vector<8x32xf32>
    %183 = arith.addf %178, %182 : vector<8x32xf32>
    %184 = vector.shape_cast %183 : vector<8x32xf32> to vector<1x8x32xf32>
    %c0_82 = arith.constant 0 : index
    %c0_83 = arith.constant 0 : index
    %c0_84 = arith.constant 0 : index
    %185 = vector.load %arg15[%c0_82, %c0_83, %c0_84] : memref<1x8x32xf32, #tpu.memory_space<vmem>>, vector<1x8x32xf32>
    tpu.vector_store %arg15[%c0_82, %c0_83, %c0_84], %184 {strides = array<i32>} : memref<1x8x32xf32, #tpu.memory_space<vmem>>, vector<1x8x32xf32>,
    return
  }
  func.func @transform_0(%arg0: i32) -> (i32, i32, i32) {
    %c0_i32 = arith.constant 0 : i32
    %c0_i32_0 = arith.constant 0 : i32
    %c0_i32_1 = arith.constant 0 : i32
    return %arg0, %c0_i32, %c0_i32_0 : i32, i32, i32
  }
  func.func @transform_1(%arg0: i32) -> (i32, i32, i32, i32) {
    %c0_i32 = arith.constant 0 : i32
    %c0_i32_0 = arith.constant 0 : i32
    %c0_i32_1 = arith.constant 0 : i32
    %c0_i32_2 = arith.constant 0 : i32
    return %arg0, %c0_i32, %c0_i32_0, %c0_i32_1 : i32, i32, i32, i32
  }
  func.func @transform_2(%arg0: i32) -> (i32, i32) {
    %c0_i32 = arith.constant 0 : i32
    %c0_i32_0 = arith.constant 0 : i32
    %c0_i32_1 = arith.constant 0 : i32
    return %c0_i32, %c0_i32_0 : i32, i32
  }
  func.func @transform_3(%arg0: i32) -> (i32, i32) {
    %c0_i32 = arith.constant 0 : i32
    %c0_i32_0 = arith.constant 0 : i32
    %c0_i32_1 = arith.constant 0 : i32
    return %c0_i32, %c0_i32_0 : i32, i32
  }
  func.func @transform_4(%arg0: i32) -> (i32, i32) {
    %c0_i32 = arith.constant 0 : i32
    %c0_i32_0 = arith.constant 0 : i32
    %c0_i32_1 = arith.constant 0 : i32
    return %c0_i32, %c0_i32_0 : i32, i32
  }
  func.func @transform_5(%arg0: i32) -> (i32, i32) {
    %c0_i32 = arith.constant 0 : i32
    %c0_i32_0 = arith.constant 0 : i32
    %c0_i32_1 = arith.constant 0 : i32
    return %c0_i32, %c0_i32_0 : i32, i32
  }
  func.func @transform_6(%arg0: i32) -> (i32, i32) {
    %c0_i32 = arith.constant 0 : i32
    %c0_i32_0 = arith.constant 0 : i32
    %c0_i32_1 = arith.constant 0 : i32
    return %c0_i32, %c0_i32_0 : i32, i32
  }
  func.func @transform_7(%arg0: i32) -> (i32, i32) {
    %c0_i32 = arith.constant 0 : i32
    %c0_i32_0 = arith.constant 0 : i32
    %c0_i32_1 = arith.constant 0 : i32
    return %c0_i32, %c0_i32_0 : i32, i32
  }
  func.func @transform_8(%arg0: i32) -> (i32, i32) {
    %c0_i32 = arith.constant 0 : i32
    %c0_i32_0 = arith.constant 0 : i32
    %c0_i32_1 = arith.constant 0 : i32
    return %c0_i32, %c0_i32_0 : i32, i32
  }
  func.func @transform_9(%arg0: i32) -> (i32, i32) {
    %c0_i32 = arith.constant 0 : i32
    %c0_i32_0 = arith.constant 0 : i32
    %c0_i32_1 = arith.constant 0 : i32
    return %c0_i32, %c0_i32_0 : i32, i32
  }
  func.func @transform_10(%arg0: i32) -> (i32, i32) {
    %c0_i32 = arith.constant 0 : i32
    %c0_i32_0 = arith.constant 0 : i32
    %c0_i32_1 = arith.constant 0 : i32
    return %c0_i32, %c0_i32_0 : i32, i32
  }
  func.func @transform_11(%arg0: i32) -> (i32, i32) {
    %c0_i32 = arith.constant 0 : i32
    %c0_i32_0 = arith.constant 0 : i32
    %c0_i32_1 = arith.constant 0 : i32
    return %c0_i32, %c0_i32_0 : i32, i32
  }
  func.func @transform_12(%arg0: i32) -> (i32, i32) {
    %c0_i32 = arith.constant 0 : i32
    %c0_i32_0 = arith.constant 0 : i32
    %c0_i32_1 = arith.constant 0 : i32
    return %c0_i32, %c0_i32_0 : i32, i32
  }
  func.func @transform_13(%arg0: i32) -> (i32, i32) {
    %c0_i32 = arith.constant 0 : i32
    %c0_i32_0 = arith.constant 0 : i32
    %c0_i32_1 = arith.constant 0 : i32
    return %c0_i32, %c0_i32_0 : i32, i32
  }
  func.func @transform_14(%arg0: i32) -> (i32, i32, i32) {
    %c0_i32 = arith.constant 0 : i32
    %c0_i32_0 = arith.constant 0 : i32
    %c0_i32_1 = arith.constant 0 : i32
    return %arg0, %c0_i32, %c0_i32_0 : i32, i32, i32
  }
}

</mosaic_0001>

<llo_original>
// kernel: tpu_custom_call.1
$region0: #{tpu_custom_call.1}
  #allocation0 [shape = 'u32[]', space=smem, size = 0x4, offset = 0x4, fixed_abs, tag = 'smem constant byte address 0x4 - core index']
  #allocation1 [shape = 'u32[144,128]{1,0:T(1,128)}', space=vmem, size = 0x12000, scoped, tag = 'internal scratch']
  #allocation2 [shape = 'bf16[8,96]{1,0:T(8,128)(2,1)}', space=vmem, size = 0x800, scoped, tag = 'scratch operand']
  #allocation3 [shape = 'f32[8,32]{1,0:T(8,128)}', space=vmem, size = 0x1000, scoped, tag = 'scratch operand']
  %s0 = inlined_call_operand.vmem [shape: f32[2,8,32], index: 0, kind: input, shape index: {}]
  %s1 = inlined_call_operand.vmem [shape: bf16[2,4,8,8], index: 1, kind: input, shape index: {}]
  %s2 = inlined_call_operand.hbm [shape: bf16[32,96], index: 2, kind: input, shape index: {}]
  %s3 = inlined_call_operand.vmem [shape: f32[1,96], index: 3, kind: input, shape index: {}]
  %s4 = inlined_call_operand.hbm [shape: bf16[32,32], index: 4, kind: input, shape index: {}]
  %s5 = inlined_call_operand.vmem [shape: f32[1,32], index: 5, kind: input, shape index: {}]
  %s6 = inlined_call_operand.vmem [shape: f32[1,32], index: 6, kind: input, shape index: {}]
  %s7 = inlined_call_operand.vmem [shape: f32[1,32], index: 7, kind: input, shape index: {}]
  %s8 = inlined_call_operand.hbm [shape: bf16[32,64], index: 8, kind: input, shape index: {}]
  %s9 = inlined_call_operand.vmem [shape: f32[1,64], index: 9, kind: input, shape index: {}]
  %s10 = inlined_call_operand.vmem [shape: bf16[64,32], index: 10, kind: input, shape index: {}]
  %s11 = inlined_call_operand.vmem [shape: f32[1,32], index: 11, kind: input, shape index: {}]
  %s12 = inlined_call_operand.vmem [shape: f32[1,32], index: 12, kind: input, shape index: {}]
  %s13 = inlined_call_operand.vmem [shape: f32[1,32], index: 13, kind: input, shape index: {}]
  %s14 = inlined_call_operand.hbm [shape: f32[2,8,32], index: 14, kind: output, shape index: {}]
  %s15 = sld [smem:[#allocation0]]
  $region101: #{tpu_custom_call.1} parent=0
    _
  %s17 = ssub.s32 1, %s15
  %s18 = scalar_select 0, %s17, %s15
  $region1: #{tpu_custom_call.1} parent=0
    #allocation4 [shape = 'u8[8192]{0}', space=vmem, size = 0x2000, scoped, tag = 'input window, operand 2, single buffered']
    #allocation5 [shape = 's32[2]{0}', space=sflag, size = 0x8, scoped, tag = 'scoped memory for tpu_custom_call.1']
    #allocation6 [shape = 's32[2]{0}', space=sflag, size = 0x8, scoped, tag = 'scoped memory for tpu_custom_call.1']
    #allocation7 [shape = 'u8[8192]{0}', space=vmem, size = 0x2000, scoped, tag = 'input window, operand 4, single buffered']
    #allocation8 [shape = 's32[1]{0}', space=sflag, size = 0x4, scoped, tag = 'scoped memory for tpu_custom_call.1']
    #allocation9 [shape = 'u8[8192]{0}', space=vmem, size = 0x2000, scoped, tag = 'input window, operand 8, single buffered']
    #allocation10 [shape = 'u8[8192]{0}', space=vmem, size = 0x2000, scoped, tag = 'output window, operand 0']
    %19 = vsyncpa [#allocation5], 0
    %20 = vsyncpa [#allocation8], 0
    %21 = vsyncpa [#allocation6], 0
    %s22 = scalar_lea.sflag [#allocation6], 1
    %23 = vsyncpa %s22, 0
    loop: start=0, step=1, limit=4
    $region2: #{tpu_custom_call.1} parent=1 // loop_pre_header
      _
    $region3: #{tpu_custom_call.1} parent=1 // loop_header
      %s25 = sphi 0, %s29
      %p26 = scmp.ge.s32.totalorder %s25, 4
      %s35 = sphi 0, %s37
      %s38 = sphi 0, %s35
      %s39 = sphi 0, %s38
      %s55 = sphi 0, %s39
      %s61 = sphi 0, %s63
      %s64 = sphi 0, %s61
      %s65 = sphi 0, %s64
      %s81 = sphi 0, %s65
      %s85 = sphi 0, %s85
      %s87 = sphi 0, %s85
      %s88 = sphi 0, %s87
      %s102 = sphi 0, %s88
      %s106 = sphi 0, %s106
      %s108 = sphi 0, %s106
      %s109 = sphi 0, %s108
      %s123 = sphi 0, %s109
      %s127 = sphi 0, %s127
      %s129 = sphi 0, %s127
      %s130 = sphi 0, %s129
      %s144 = sphi 0, %s130
      %s148 = sphi 0, %s148
      %s150 = sphi 0, %s148
      %s151 = sphi 0, %s150
      %s165 = sphi 0, %s151
      %s169 = sphi 0, %s169
      %s171 = sphi 0, %s169
      %s172 = sphi 0, %s171
      %s186 = sphi 0, %s172
      %s190 = sphi 0, %s190
      %s192 = sphi 0, %s190
      %s193 = sphi 0, %s192
      %s207 = sphi 0, %s193
      %s211 = sphi 0, %s211
      %s213 = sphi 0, %s211
      %s214 = sphi 0, %s213
      %s228 = sphi 0, %s214
      %s232 = sphi 0, %s232
      %s234 = sphi 0, %s232
      %s235 = sphi 0, %s234
      %s249 = sphi 0, %s235
      %s253 = sphi 0, %s253
      %s255 = sphi 0, %s253
      %s256 = sphi 0, %s255
      %s270 = sphi 0, %s256
      %s274 = sphi 0, %s274
      %s276 = sphi 0, %s274
      %s277 = sphi 0, %s276
      %s291 = sphi 0, %s277
      %s295 = sphi 0, %s295
      %s297 = sphi 0, %s295
      %s298 = sphi 0, %s297
      %s312 = sphi 0, %s298
      %s316 = sphi 0, %s316
      %s318 = sphi 0, %s316
      %s319 = sphi 0, %s318
      %s333 = sphi 0, %s319
      %s339 = sphi 0, %s341
      %s342 = sphi 0, %s339
      %s343 = sphi 0, %s342
      %s359 = sphi 0, %s343
    $region4: #{tpu_custom_call.1} parent=1 // loop_header_branch
      %28 = sbr.rel (%p26) target = $region8
    $region5: #{tpu_custom_call.1} parent=1 // loop_body
      %s30 = ssub.s32 %s25, 1
      %s31 = ssub.s32 %s25, 2
      %s32 = sadd.s32 %s25, 1
      %s33 = ssub.s32 %s25, %s32
      %p34 = scmp.eq.s32.totalorder %s33, 0
      %s36 = sadd.s32 %s35, 1
      %s37 = scalar_select %p34, %s35, %s36
      %p40 = pneg %p34
      %p41 = scmp.eq.s32.totalorder %s25, 1
      %p42 = por %p40, %p41
      %p43 = scmp.ne.s32.totalorder %s35, %s38
      %p44 = scmp.eq.s32.totalorder %s25, 0
      %p45 = por %p43, %p44
      %p46 = scmp.ne.s32.totalorder %s35, %s38
      %p47 = scmp.eq.s32.totalorder %s30, 1
      %p48 = por %p46, %p47
      %p49 = scmp.ne.s32.totalorder %s38, %s39
      %p50 = scmp.eq.s32.totalorder %s30, 0
      %p51 = por %p49, %p50
      %p52 = scmp.ne.s32.totalorder %s38, %s39
      %p53 = scmp.eq.s32.totalorder %s31, 1
      %p54 = por %p52, %p53
      %p56 = scmp.ne.s32.totalorder %s39, %s55
      %p57 = scmp.eq.s32.totalorder %s31, 0
      %p58 = por %p56, %p57
      %s59 = ssub.s32 %s25, %s32
      %p60 = scmp.eq.s32.totalorder %s59, 0
      %s62 = sadd.s32 %s61, 1
      %s63 = scalar_select %p60, %s61, %s62
      %p66 = pneg %p60
      %p67 = scmp.eq.s32.totalorder %s25, 1
      %p68 = por %p66, %p67
      %p69 = scmp.ne.s32.totalorder %s61, %s64
      %p70 = scmp.eq.s32.totalorder %s25, 0
      %p71 = por %p69, %p70
      %p72 = scmp.ne.s32.totalorder %s61, %s64
      %p73 = scmp.eq.s32.totalorder %s30, 1
      %p74 = por %p72, %p73
      %p75 = scmp.ne.s32.totalorder %s64, %s65
      %p76 = scmp.eq.s32.totalorder %s30, 0
      %p77 = por %p75, %p76
      %p78 = scmp.ne.s32.totalorder %s64, %s65
      %p79 = scmp.eq.s32.totalorder %s31, 1
      %p80 = por %p78, %p79
      %p82 = scmp.ne.s32.totalorder %s65, %s81
      %p83 = scmp.eq.s32.totalorder %s31, 0
      %p84 = por %p82, %p83
      %s86 = sadd.s32 %s85, 1
      %p89 = scmp.eq.s32.totalorder %s25, 1
      %p90 = scmp.ne.s32.totalorder %s85, %s87
      %p91 = scmp.eq.s32.totalorder %s25, 0
      %p92 = por %p90, %p91
      %p93 = scmp.ne.s32.totalorder %s85, %s87
      %p94 = scmp.eq.s32.totalorder %s30, 1
      %p95 = por %p93, %p94
      %p96 = scmp.ne.s32.totalorder %s87, %s88
      %p97 = scmp.eq.s32.totalorder %s30, 0
      %p98 = por %p96, %p97
      %p99 = scmp.ne.s32.totalorder %s87, %s88
      %p100 = scmp.eq.s32.totalorder %s31, 1
      %p101 = por %p99, %p100
      %p103 = scmp.ne.s32.totalorder %s88, %s102
      %p104 = scmp.eq.s32.totalorder %s31, 0
      %p105 = por %p103, %p104
      %s107 = sadd.s32 %s106, 1
      %p110 = scmp.eq.s32.totalorder %s25, 1
      %p111 = scmp.ne.s32.totalorder %s106, %s108
      %p112 = scmp.eq.s32.totalorder %s25, 0
      %p113 = por %p111, %p112
      %p114 = scmp.ne.s32.totalorder %s106, %s108
      %p115 = scmp.eq.s32.totalorder %s30, 1
      %p116 = por %p114, %p115
      %p117 = scmp.ne.s32.totalorder %s108, %s109
      %p118 = scmp.eq.s32.totalorder %s30, 0
      %p119 = por %p117, %p118
      %p120 = scmp.ne.s32.totalorder %s108, %s109
      %p121 = scmp.eq.s32.totalorder %s31, 1
      %p122 = por %p120, %p121
      %p124 = scmp.ne.s32.totalorder %s109, %s123
      %p125 = scmp.eq.s32.totalorder %s31, 0
      %p126 = por %p124, %p125
      %s128 = sadd.s32 %s127, 1
      %p131 = scmp.eq.s32.totalorder %s25, 1
      %p132 = scmp.ne.s32.totalorder %s127, %s129
      %p133 = scmp.eq.s32.totalorder %s25, 0
      %p134 = por %p132, %p133
      %p135 = scmp.ne.s32.totalorder %s127, %s129
      %p136 = scmp.eq.s32.totalorder %s30, 1
      %p137 = por %p135, %p136
      %p138 = scmp.ne.s32.totalorder %s129, %s130
      %p139 = scmp.eq.s32.totalorder %s30, 0
      %p140 = por %p138, %p139
      %p141 = scmp.ne.s32.totalorder %s129, %s130
      %p142 = scmp.eq.s32.totalorder %s31, 1
      %p143 = por %p141, %p142
      %p145 = scmp.ne.s32.totalorder %s130, %s144
      %p146 = scmp.eq.s32.totalorder %s31, 0
      %p147 = por %p145, %p146
      %s149 = sadd.s32 %s148, 1
      %p152 = scmp.eq.s32.totalorder %s25, 1
      %p153 = scmp.ne.s32.totalorder %s148, %s150
      %p154 = scmp.eq.s32.totalorder %s25, 0
      %p155 = por %p153, %p154
      %p156 = scmp.ne.s32.totalorder %s148, %s150
      %p157 = scmp.eq.s32.totalorder %s30, 1
      %p158 = por %p156, %p157
      %p159 = scmp.ne.s32.totalorder %s150, %s151
      %p160 = scmp.eq.s32.totalorder %s30, 0
      %p161 = por %p159, %p160
      %p162 = scmp.ne.s32.totalorder %s150, %s151
      %p163 = scmp.eq.s32.totalorder %s31, 1
      %p164 = por %p162, %p163
      %p166 = scmp.ne.s32.totalorder %s151, %s165
      %p167 = scmp.eq.s32.totalorder %s31, 0
      %p168 = por %p166, %p167
      %s170 = sadd.s32 %s169, 1
      %p173 = scmp.eq.s32.totalorder %s25, 1
      %p174 = scmp.ne.s32.totalorder %s169, %s171
      %p175 = scmp.eq.s32.totalorder %s25, 0
      %p176 = por %p174, %p175
      %p177 = scmp.ne.s32.totalorder %s169, %s171
      %p178 = scmp.eq.s32.totalorder %s30, 1
      %p179 = por %p177, %p178
      %p180 = scmp.ne.s32.totalorder %s171, %s172
      %p181 = scmp.eq.s32.totalorder %s30, 0
      %p182 = por %p180, %p181
      %p183 = scmp.ne.s32.totalorder %s171, %s172
      %p184 = scmp.eq.s32.totalorder %s31, 1
      %p185 = por %p183, %p184
      %p187 = scmp.ne.s32.totalorder %s172, %s186
      %p188 = scmp.eq.s32.totalorder %s31, 0
      %p189 = por %p187, %p188
      %s191 = sadd.s32 %s190, 1
      %p194 = scmp.eq.s32.totalorder %s25, 1
      %p195 = scmp.ne.s32.totalorder %s190, %s192
      %p196 = scmp.eq.s32.totalorder %s25, 0
      %p197 = por %p195, %p196
      %p198 = scmp.ne.s32.totalorder %s190, %s192
      %p199 = scmp.eq.s32.totalorder %s30, 1
      %p200 = por %p198, %p199
      %p201 = scmp.ne.s32.totalorder %s192, %s193
      %p202 = scmp.eq.s32.totalorder %s30, 0
      %p203 = por %p201, %p202
      %p204 = scmp.ne.s32.totalorder %s192, %s193
      %p205 = scmp.eq.s32.totalorder %s31, 1
      %p206 = por %p204, %p205
      %p208 = scmp.ne.s32.totalorder %s193, %s207
      %p209 = scmp.eq.s32.totalorder %s31, 0
      %p210 = por %p208, %p209
      %s212 = sadd.s32 %s211, 1
      %p215 = scmp.eq.s32.totalorder %s25, 1
      %p216 = scmp.ne.s32.totalorder %s211, %s213
      %p217 = scmp.eq.s32.totalorder %s25, 0
      %p218 = por %p216, %p217
      %p219 = scmp.ne.s32.totalorder %s211, %s213
      %p220 = scmp.eq.s32.totalorder %s30, 1
      %p221 = por %p219, %p220
      %p222 = scmp.ne.s32.totalorder %s213, %s214
      %p223 = scmp.eq.s32.totalorder %s30, 0
      %p224 = por %p222, %p223
      %p225 = scmp.ne.s32.totalorder %s213, %s214
      %p226 = scmp.eq.s32.totalorder %s31, 1
      %p227 = por %p225, %p226
      %p229 = scmp.ne.s32.totalorder %s214, %s228
      %p230 = scmp.eq.s32.totalorder %s31, 0
      %p231 = por %p229, %p230
      %s233 = sadd.s32 %s232, 1
      %p236 = scmp.eq.s32.totalorder %s25, 1
      %p237 = scmp.ne.s32.totalorder %s232, %s234
      %p238 = scmp.eq.s32.totalorder %s25, 0
      %p239 = por %p237, %p238
      %p240 = scmp.ne.s32.totalorder %s232, %s234
      %p241 = scmp.eq.s32.totalorder %s30, 1
      %p242 = por %p240, %p241
      %p243 = scmp.ne.s32.totalorder %s234, %s235
      %p244 = scmp.eq.s32.totalorder %s30, 0
      %p245 = por %p243, %p244
      %p246 = scmp.ne.s32.totalorder %s234, %s235
      %p247 = scmp.eq.s32.totalorder %s31, 1
      %p248 = por %p246, %p247
      %p250 = scmp.ne.s32.totalorder %s235, %s249
      %p251 = scmp.eq.s32.totalorder %s31, 0
      %p252 = por %p250, %p251
      %s254 = sadd.s32 %s253, 1
      %p257 = scmp.eq.s32.totalorder %s25, 1
      %p258 = scmp.ne.s32.totalorder %s253, %s255
      %p259 = scmp.eq.s32.totalorder %s25, 0
      %p260 = por %p258, %p259
      %p261 = scmp.ne.s32.totalorder %s253, %s255
      %p262 = scmp.eq.s32.totalorder %s30, 1
      %p263 = por %p261, %p262
      %p264 = scmp.ne.s32.totalorder %s255, %s256
      %p265 = scmp.eq.s32.totalorder %s30, 0
      %p266 = por %p264, %p265
      %p267 = scmp.ne.s32.totalorder %s255, %s256
      %p268 = scmp.eq.s32.totalorder %s31, 1
      %p269 = por %p267, %p268
      %p271 = scmp.ne.s32.totalorder %s256, %s270
      %p272 = scmp.eq.s32.totalorder %s31, 0
      %p273 = por %p271, %p272
      %s275 = sadd.s32 %s274, 1
      %p278 = scmp.eq.s32.totalorder %s25, 1
      %p279 = scmp.ne.s32.totalorder %s274, %s276
      %p280 = scmp.eq.s32.totalorder %s25, 0
      %p281 = por %p279, %p280
      %p282 = scmp.ne.s32.totalorder %s274, %s276
      %p283 = scmp.eq.s32.totalorder %s30, 1
      %p284 = por %p282, %p283
      %p285 = scmp.ne.s32.totalorder %s276, %s277
      %p286 = scmp.eq.s32.totalorder %s30, 0
      %p287 = por %p285, %p286
      %p288 = scmp.ne.s32.totalorder %s276, %s277
      %p289 = scmp.eq.s32.totalorder %s31, 1
      %p290 = por %p288, %p289
      %p292 = scmp.ne.s32.totalorder %s277, %s291
      %p293 = scmp.eq.s32.totalorder %s31, 0
      %p294 = por %p292, %p293
      %s296 = sadd.s32 %s295, 1
      %p299 = scmp.eq.s32.totalorder %s25, 1
      %p300 = scmp.ne.s32.totalorder %s295, %s297
      %p301 = scmp.eq.s32.totalorder %s25, 0
      %p302 = por %p300, %p301
      %p303 = scmp.ne.s32.totalorder %s295, %s297
      %p304 = scmp.eq.s32.totalorder %s30, 1
      %p305 = por %p303, %p304
      %p306 = scmp.ne.s32.totalorder %s297, %s298
      %p307 = scmp.eq.s32.totalorder %s30, 0
      %p308 = por %p306, %p307
      %p309 = scmp.ne.s32.totalorder %s297, %s298
      %p310 = scmp.eq.s32.totalorder %s31, 1
      %p311 = por %p309, %p310
      %p313 = scmp.ne.s32.totalorder %s298, %s312
      %p314 = scmp.eq.s32.totalorder %s31, 0
      %p315 = por %p313, %p314
      %s317 = sadd.s32 %s316, 1
      %p320 = scmp.eq.s32.totalorder %s25, 1
      %p321 = scmp.ne.s32.totalorder %s316, %s318
      %p322 = scmp.eq.s32.totalorder %s25, 0
      %p323 = por %p321, %p322
      %p324 = scmp.ne.s32.totalorder %s316, %s318
      %p325 = scmp.eq.s32.totalorder %s30, 1
      %p326 = por %p324, %p325
      %p327 = scmp.ne.s32.totalorder %s318, %s319
      %p328 = scmp.eq.s32.totalorder %s30, 0
      %p329 = por %p327, %p328
      %p330 = scmp.ne.s32.totalorder %s318, %s319
      %p331 = scmp.eq.s32.totalorder %s31, 1
      %p332 = por %p330, %p331
      %p334 = scmp.ne.s32.totalorder %s319, %s333
      %p335 = scmp.eq.s32.totalorder %s31, 0
      %p336 = por %p334, %p335
      %s337 = ssub.s32 %s25, %s32
      %p338 = scmp.eq.s32.totalorder %s337, 0
      %s340 = sadd.s32 %s339, 1
      %s341 = scalar_select %p338, %s339, %s340
      %p344 = pneg %p338
      %p345 = scmp.eq.s32.totalorder %s25, 1
      %p346 = por %p344, %p345
      %p347 = scmp.ne.s32.totalorder %s339, %s342
      %p348 = scmp.eq.s32.totalorder %s25, 0
      %p349 = por %p347, %p348
      %p350 = scmp.ne.s32.totalorder %s339, %s342
      %p351 = scmp.eq.s32.totalorder %s30, 1
      %p352 = por %p350, %p351
      %p353 = scmp.ne.s32.totalorder %s342, %s343
      %p354 = scmp.eq.s32.totalorder %s30, 0
      %p355 = por %p353, %p354
      %p356 = scmp.ne.s32.totalorder %s342, %s343
      %p357 = scmp.eq.s32.totalorder %s31, 1
      %p358 = por %p356, %p357
      %p360 = scmp.ne.s32.totalorder %s343, %s359
      %p361 = scmp.eq.s32.totalorder %s31, 0
      %p362 = por %p360, %p361
      %p363 = scmp.le.s32.totalorder 1, %s25
      %p364 = scmp.lt.s32.totalorder %s25, 3
      %p365 = pnand %p363, %p364
      %p366 = pneg %p365
      // Predicated region
      $region9: #{tpu_custom_call.1} parent=5 // pred_check
        _
      $region10: #{tpu_custom_call.1} parent=5 // pred_check_branch
        %368 = sbr.rel (%p365) target = $region12
      $region11: #{tpu_custom_call.1} parent=5 // pred_region
        %s369 = ssub.s32 %s25, 1
        // Predicated region
        $region13: #{tpu_custom_call.1} parent=11 // pred_check
          %p370 = pneg %p98
        $region14: #{tpu_custom_call.1} parent=11 // pred_check_branch
          %372 = sbr.rel (%p370) target = $region16
        $region15: #{tpu_custom_call.1} parent=11 // pred_region
          %s374 = ssub.s32 256, 256
          %375 = vsyncadd [#allocation5], %s374
          %s376 = sshll.u32 [#allocation4], 4
          %s377 = int_to_ptr.vmem [resolvable:$true] %s376
          %382 = dma.hbm_to_vmem [thread:$0]  %s2, 256, %s377, [#allocation5], 64, 64, 4
        $region16: #{tpu_custom_call.1} parent=11 // pred_fallthru
          _
        // Predicated region
        $region17: #{tpu_custom_call.1} parent=11 // pred_check
          %p383 = pneg %p119
        $region18: #{tpu_custom_call.1} parent=11 // pred_check_branch
          %385 = sbr.rel (%p383) target = $region20
        $region19: #{tpu_custom_call.1} parent=11 // pred_region
          _
        $region20: #{tpu_custom_call.1} parent=11 // pred_fallthru
          _
        // Predicated region
        $region21: #{tpu_custom_call.1} parent=11 // pred_check
          %p386 = pneg %p140
        $region22: #{tpu_custom_call.1} parent=11 // pred_check_branch
          %388 = sbr.rel (%p386) target = $region24
        $region23: #{tpu_custom_call.1} parent=11 // pred_region
          %s390 = ssub.s32 256, 256
          %391 = vsyncadd [#allocation8], %s390
          %s392 = sshll.u32 [#allocation7], 4
          %s393 = int_to_ptr.vmem [resolvable:$true] %s392
          %398 = dma.hbm_to_vmem [thread:$0]  %s4, 256, %s393, [#allocation8], 64, 64, 4
        $region24: #{tpu_custom_call.1} parent=11 // pred_fallthru
          _
        // Predicated region
        $region25: #{tpu_custom_call.1} parent=11 // pred_check
          %p399 = pneg %p161
        $region26: #{tpu_custom_call.1} parent=11 // pred_check_branch
          %401 = sbr.rel (%p399) target = $region28
        $region27: #{tpu_custom_call.1} parent=11 // pred_region
          _
        $region28: #{tpu_custom_call.1} parent=11 // pred_fallthru
          _
        // Predicated region
        $region29: #{tpu_custom_call.1} parent=11 // pred_check
          %p402 = pneg %p182
        $region30: #{tpu_custom_call.1} parent=11 // pred_check_branch
          %404 = sbr.rel (%p402) target = $region32
        $region31: #{tpu_custom_call.1} parent=11 // pred_region
          _
        $region32: #{tpu_custom_call.1} parent=11 // pred_fallthru
          _
        // Predicated region
        $region33: #{tpu_custom_call.1} parent=11 // pred_check
          %p405 = pneg %p203
        $region34: #{tpu_custom_call.1} parent=11 // pred_check_branch
          %407 = sbr.rel (%p405) target = $region36
        $region35: #{tpu_custom_call.1} parent=11 // pred_region
          _
        $region36: #{tpu_custom_call.1} parent=11 // pred_fallthru
          _
        // Predicated region
        $region37: #{tpu_custom_call.1} parent=11 // pred_check
          %p408 = pneg %p224
        $region38: #{tpu_custom_call.1} parent=11 // pred_check_branch
          %410 = sbr.rel (%p408) target = $region40
        $region39: #{tpu_custom_call.1} parent=11 // pred_region
          %s412 = ssub.s32 256, 256
          %413 = vsyncadd [#allocation8], %s412
          %s414 = sshll.u32 [#allocation9], 4
          %s415 = int_to_ptr.vmem [resolvable:$true] %s414
          %420 = dma.hbm_to_vmem [thread:$0]  %s8, 256, %s415, [#allocation8], 64, 64, 4
        $region40: #{tpu_custom_call.1} parent=11 // pred_fallthru
          _
        // Predicated region
        $region41: #{tpu_custom_call.1} parent=11 // pred_check
          %p421 = pneg %p245
        $region42: #{tpu_custom_call.1} parent=11 // pred_check_branch
          %423 = sbr.rel (%p421) target = $region44
        $region43: #{tpu_custom_call.1} parent=11 // pred_region
          _
        $region44: #{tpu_custom_call.1} parent=11 // pred_fallthru
          _
        // Predicated region
        $region45: #{tpu_custom_call.1} parent=11 // pred_check
          %p424 = pneg %p266
        $region46: #{tpu_custom_call.1} parent=11 // pred_check_branch
          %426 = sbr.rel (%p424) target = $region48
        $region47: #{tpu_custom_call.1} parent=11 // pred_region
          _
        $region48: #{tpu_custom_call.1} parent=11 // pred_fallthru
          _
        // Predicated region
        $region49: #{tpu_custom_call.1} parent=11 // pred_check
          %p427 = pneg %p287
        $region50: #{tpu_custom_call.1} parent=11 // pred_check_branch
          %429 = sbr.rel (%p427) target = $region52
        $region51: #{tpu_custom_call.1} parent=11 // pred_region
          _
        $region52: #{tpu_custom_call.1} parent=11 // pred_fallthru
          _
        // Predicated region
        $region53: #{tpu_custom_call.1} parent=11 // pred_check
          %p430 = pneg %p308
        $region54: #{tpu_custom_call.1} parent=11 // pred_check_branch
          %432 = sbr.rel (%p430) target = $region56
        $region55: #{tpu_custom_call.1} parent=11 // pred_region
          _
        $region56: #{tpu_custom_call.1} parent=11 // pred_fallthru
          _
        // Predicated region
        $region57: #{tpu_custom_call.1} parent=11 // pred_check
          %p433 = pneg %p329
        $region58: #{tpu_custom_call.1} parent=11 // pred_check_branch
          %435 = sbr.rel (%p433) target = $region60
        $region59: #{tpu_custom_call.1} parent=11 // pred_region
          _
        $region60: #{tpu_custom_call.1} parent=11 // pred_fallthru
          _
      $region12: #{tpu_custom_call.1} parent=5 // pred_fallthru
        _
      %p436 = scmp.lt.s32.totalorder %s25, 2
      // Predicated region
      $region61: #{tpu_custom_call.1} parent=5 // pred_check
        %p437 = pneg %p436
      $region62: #{tpu_custom_call.1} parent=5 // pred_check_branch
        %439 = sbr.rel (%p437) target = $region64
      $region63: #{tpu_custom_call.1} parent=5 // pred_region
        // Predicated region
        $region65: #{tpu_custom_call.1} parent=63 // pred_check
          %p440 = pneg %p45
        $region66: #{tpu_custom_call.1} parent=63 // pred_check_branch
          %442 = sbr.rel (%p440) target = $region68
        $region67: #{tpu_custom_call.1} parent=63 // pred_region
          %p443 = scmp.lt.s32.totalorder %s25, 1
          %s444 = scalar_select %p443, %s25, 1
          %s445 = smul.addr %s444, 8
          %s446 = scalar_lea.vmem %s0, %s445
        $region68: #{tpu_custom_call.1} parent=63 // pred_fallthru
          _
        // Predicated region
        $region69: #{tpu_custom_call.1} parent=63 // pred_check
          %p447 = pneg %p71
        $region70: #{tpu_custom_call.1} parent=63 // pred_check_branch
          %449 = sbr.rel (%p447) target = $region72
        $region71: #{tpu_custom_call.1} parent=63 // pred_region
          %p450 = scmp.lt.s32.totalorder %s25, 1
          %s451 = scalar_select %p450, %s25, 1
          %s452 = smul.addr %s451, 4
          %s453 = smul.addr %s452, 4
          %s454 = scalar_lea.vmem %s1, %s453
        $region72: #{tpu_custom_call.1} parent=63 // pred_fallthru
          _
      $region64: #{tpu_custom_call.1} parent=5 // pred_fallthru
        _
      %p455 = scmp.le.s32.totalorder 1, %s25
      %p456 = scmp.lt.s32.totalorder %s25, 3
      %p457 = pnand %p455, %p456
      %p458 = pneg %p457
      // Predicated region
      $region73: #{tpu_custom_call.1} parent=5 // pred_check
        _
      $region74: #{tpu_custom_call.1} parent=5 // pred_check_branch
        %460 = sbr.rel (%p457) target = $region76
      $region75: #{tpu_custom_call.1} parent=5 // pred_region
        %s461 = ssub.s32 %s25, 1
        // Predicated region
        $region77: #{tpu_custom_call.1} parent=75 // pred_check
          %p462 = pneg %p98
        $region78: #{tpu_custom_call.1} parent=75 // pred_check_branch
          %464 = sbr.rel (%p462) target = $region80
        $region79: #{tpu_custom_call.1} parent=75 // pred_region
          %465 = dma.done [#allocation5], 256
        $region80: #{tpu_custom_call.1} parent=75 // pred_fallthru
          _
        // Predicated region
        $region81: #{tpu_custom_call.1} parent=75 // pred_check
          %p466 = pneg %p140
        $region82: #{tpu_custom_call.1} parent=75 // pred_check_branch
          %468 = sbr.rel (%p466) target = $region84
        $region83: #{tpu_custom_call.1} parent=75 // pred_region
          %469 = dma.done [#allocation8], 256
        $region84: #{tpu_custom_call.1} parent=75 // pred_fallthru
          _
        // Predicated region
        $region85: #{tpu_custom_call.1} parent=75 // pred_check
          %p470 = pneg %p224
        $region86: #{tpu_custom_call.1} parent=75 // pred_check_branch
          %472 = sbr.rel (%p470) target = $region88
        $region87: #{tpu_custom_call.1} parent=75 // pred_region
          %473 = dma.done [#allocation8], 256
        $region88: #{tpu_custom_call.1} parent=75 // pred_fallthru
          _
        %p474 = scmp.lt.s32.totalorder %s30, 1
        %s475 = scalar_select %p474, %s30, 1
        %s476 = smul.addr %s475, 8
        %s477 = scalar_lea.vmem %s0, %s476
        %p478 = pneg %p51
        %p479 = pneg %p48
        %p480 = scmp.lt.s32.totalorder %s30, 1
        %s481 = scalar_select %p480, %s30, 1
        %s482 = smul.addr %s481, 4
        %s483 = smul.addr %s482, 4
        %s484 = scalar_lea.vmem %s1, %s483
        %p485 = pneg %p77
        %p486 = pneg %p74
        %p487 = pneg %p98
        %p488 = pneg %p95
        %p489 = pneg %p119
        %p490 = pneg %p116
        %p491 = pneg %p140
        %p492 = pneg %p137
        %p493 = pneg %p161
        %p494 = pneg %p158
        %p495 = pneg %p182
        %p496 = pneg %p179
        %p497 = pneg %p203
        %p498 = pneg %p200
        %p499 = pneg %p224
        %p500 = pneg %p221
        %p501 = pneg %p245
        %p502 = pneg %p242
        %p503 = pneg %p266
        %p504 = pneg %p263
        %p505 = pneg %p287
        %p506 = pneg %p284
        %p507 = pneg %p308
        %p508 = pneg %p305
        %p509 = pneg %p329
        %p510 = pneg %p326
        %p511 = pneg %p355
        %p512 = pneg %p352
        %s513 = sand.u32 %s342, 1
        %s514 = scalar_lea.sflag [#allocation6], %s513
        %s515 = sand.u32 %s342, 1
        %s516 = smul.addr %s515, 8
        %s517 = scalar_lea.vmem [#allocation10], %s516
        %p518 = scmp.lt.s32.totalorder %s30, 1
        %s519 = scalar_select %p518, %s30, 1
        %s520 = smul.addr %s519, 8
        %s521 = scalar_lea.vmem %s0, %s520
        %p522 = scmp.lt.s32.totalorder %s30, 1
        %s523 = scalar_select %p522, %s30, 1
        %s524 = smul.addr %s523, 4
        %s525 = smul.addr %s524, 4
        %s526 = scalar_lea.vmem %s1, %s525
        %v528 = vld [vmem:[%s521] sm:$0xff]
        %v529 = vpack.c.bf16 %v528, %v528
        %v530 = vld [vmem:[#allocation4] sm:$0xf]
        %v531 = vld [vmem:[#allocation4 + $0x4] sm:$0xf]
        %v532 = vld [vmem:[#allocation4 + $0x8] sm:$0xf]
        %v533 = vld [vmem:[#allocation4 + $0xc] sm:$0xf]
        %v534 = vld [vmem:[%s3] sm:$0x1]
        %v536 = vlaneseq
        %v537 = vshrl.u32 %v536, 7
        %v538 = vsub.s32 0, %v537
        %v539 = vrot.slane %v534, %v538
        %v545 = vunpack.c.l.b16 %v530
        %v546 = vunpack.c.l.b16 %v531
        %v547 = vunpack.c.l.b16 %v532
        %v548 = vunpack.c.l.b16 %v533
        %v549 = vpack.c.b16 %v546, %v545
        %v550 = vpack.c.b16 %v548, %v547
        %vm553 = vcmask 261120
        %v555 = vsel %vm553, %v529, 0
        %557 = vmatprep.subr.bf16.mxu0 0
        %558 = vmatpush1.bf16.msra.mxu0 %v549
        %559 = vmatprep.subr.bf16.mxu0 0
        %560 = vmatpush1.bf16.msra.mxu0 %v550
        %561 = vmatprep.subr.bf16.mxu0 0
        %562 = vmatpush1.bf16.msra.mxu0 0
        %563 = vmatprep.subr.bf16.mxu0 0
        %564 = vmatpush1.bf16.msra.mxu0 0
        %565 = vmatprep.subr.bf16.mxu0 0
        %566 = vmatpush1.bf16.msra.mxu0 0
        %567 = vmatprep.subr.bf16.mxu0 0
        %568 = vmatpush1.bf16.msra.mxu0 0
        %569 = vmatprep.subr.bf16.mxu0 0
        %570 = vmatpush1.bf16.msra.mxu0 0
        %571 = vmatprep.subr.bf16.mxu0 0
        %572 = vmatpush1.bf16.msra.mxu0 0
        %573 = vmatprep.subr.bf16.mxu0 0
        %574 = vmatpush1.bf16.msra.mxu0 0
        %575 = vmatprep.subr.bf16.mxu0 0
        %576 = vmatpush1.bf16.msra.mxu0 0
        %577 = vmatprep.subr.bf16.mxu0 0
        %578 = vmatpush1.bf16.msra.mxu0 0
        %579 = vmatprep.subr.bf16.mxu0 0
        %580 = vmatpush1.bf16.msra.mxu0 0
        %581 = vmatprep.subr.bf16.mxu0 0
        %582 = vmatpush1.bf16.msra.mxu0 0
        %583 = vmatprep.subr.bf16.mxu0 0
        %584 = vmatpush1.bf16.msra.mxu0 0
        %585 = vmatprep.subr.bf16.mxu0 0
        %586 = vmatpush1.bf16.msra.mxu0 0
        %587 = vmatprep.subr.bf16.mxu0 0
        %588 = vmatpush1.bf16.msra.mxu0 0
        %589 = vmatprep.mubr.bf16.mxu0 0
        %590 = vmatmul.mubr.bf16.gmra.mrb[0].mxu0 %v555
        %v591 = vpop.f32.mrb[0].mxu0
        %v592 = vadd.f32 %v539, %v591
        %v593 = vpop.f32.mrb[0].mxu0
        %v594 = vpop.f32.mrb[0].mxu0
        %v595 = vpop.f32.mrb[0].mxu0
        %596 = vdwg.mxu0
        %v597 = vpack.c.bf16 %v592, %v592
        %vm598 = vcmask 781312
        %599 = vst.msk [vmem:[#allocation2] sm:$0xf] %vm598, %v597
        %v600 = vld [vmem:[#allocation2] sm:$0xf]
        %v601 = vld [vmem:[%s526] sm:$0xf]
        %v602 = vunpack.c.l.bf16 %v601
        %v604 = vunpack.c.l.b16 %v600
        %v605 = vpack.c.b16 %v604, %v604
        %606 = vrot.lane.b32.xlu0 %v605, 96
        %v607 = vpop.permute.xlu0 %606
        %vm608 = vcmask 64512
        %v610 = vsel %vm608, %v600, 0
        %v613 = vsel %vm608, %v607, 0
        %615 = vmatprep.subr.bf16.mxu0 0
        %616 = vmatpush1.bf16.xpose.msra.mxu0 %v613
        %617 = vmatprep.subr.bf16.mxu0 0
        %618 = vmatpush1.bf16.xpose.msra.mxu0 0
        %619 = vmatprep.subr.bf16.mxu0 0
        %620 = vmatpush1.bf16.xpose.msra.mxu0 0
        %621 = vmatprep.subr.bf16.mxu0 0
        %622 = vmatpush1.bf16.xpose.msra.mxu0 0
        %623 = vmatprep.subr.bf16.mxu0 0
        %624 = vmatpush1.bf16.xpose.msra.mxu0 0
        %625 = vmatprep.subr.bf16.mxu0 0
        %626 = vmatpush1.bf16.xpose.msra.mxu0 0
        %627 = vmatprep.subr.bf16.mxu0 0
        %628 = vmatpush1.bf16.xpose.msra.mxu0 0
        %629 = vmatprep.subr.bf16.mxu0 0
        %630 = vmatpush1.bf16.xpose.msra.mxu0 0
        %631 = vmatprep.subr.bf16.mxu0 0
        %632 = vmatpush1.bf16.xpose.msra.mxu0 0
        %633 = vmatprep.subr.bf16.mxu0 0
        %634 = vmatpush1.bf16.xpose.msra.mxu0 0
        %635 = vmatprep.subr.bf16.mxu0 0
        %636 = vmatpush1.bf16.xpose.msra.mxu0 0
        %637 = vmatprep.subr.bf16.mxu0 0
        %638 = vmatpush1.bf16.xpose.msra.mxu0 0
        %639 = vmatprep.subr.bf16.mxu0 0
        %640 = vmatpush1.bf16.xpose.msra.mxu0 0
        %641 = vmatprep.subr.bf16.mxu0 0
        %642 = vmatpush1.bf16.xpose.msra.mxu0 0
        %643 = vmatprep.subr.bf16.mxu0 0
        %644 = vmatpush1.bf16.xpose.msra.mxu0 0
        %645 = vmatprep.subr.bf16.mxu0 0
        %646 = vmatpush1.bf16.xpose.msra.mxu0 0
        %647 = vmatprep.mubr.bf16.mxu0 0
        %648 = vmatmul.mubr.bf16.gmra.mrb[0].mxu0 %v610
        %v649 = vpop.f32.mrb[0].mxu0
        %v650 = vadd.f32 %v602, %v649
        %v651 = vpop.f32.mrb[0].mxu0
        %v652 = vpop.f32.mrb[0].mxu0
        %v653 = vpop.f32.mrb[0].mxu0
        %654 = vdwg.mxu0
        %v655 = vsel %vm608, %v650, -inf
        %656 = vmax.xlane.f32.xlu0 %v655
        %v657 = vpop.xlane.xlu0 %656
        %v658 = vsub.f32 %v650, %v657
        %v659 = vmul.f32 %v658, 1.442695
        %v660 = vpow.pop %v659
        %v661 = vsel %vm608, %v660, 0.0
        %662 = vadd.xlane.f32.xlu0 %v661
        %v663 = vpop.xlane.xlu0 %662
        %v664 = vrcp.pop %v663
        %v665 = vmul.f32 %v660, %v664
        %v666 = vpack.c.bf16 %v665, %v665
        %667 = vrot.lane.b32.xlu0 %v605, 64
        %v668 = vpop.permute.xlu0 %667
        %v670 = vsel %vm608, %v666, 0
        %vm672 = vcmask 1043456
        %v674 = vsel %vm672, %v668, 0
        %676 = vmatprep.subr.bf16.mxu0 0
        %677 = vmatpush1.bf16.msra.mxu0 %v674
        %678 = vmatprep.subr.bf16.mxu0 0
        %679 = vmatpush1.bf16.msra.mxu0 0
        %680 = vmatprep.subr.bf16.mxu0 0
        %681 = vmatpush1.bf16.msra.mxu0 0
        %682 = vmatprep.subr.bf16.mxu0 0
        %683 = vmatpush1.bf16.msra.mxu0 0
        %684 = vmatprep.subr.bf16.mxu0 0
        %685 = vmatpush1.bf16.msra.mxu0 0
        %686 = vmatprep.subr.bf16.mxu0 0
        %687 = vmatpush1.bf16.msra.mxu0 0
        %688 = vmatprep.subr.bf16.mxu0 0
        %689 = vmatpush1.bf16.msra.mxu0 0
        %690 = vmatprep.subr.bf16.mxu0 0
        %691 = vmatpush1.bf16.msra.mxu0 0
        %692 = vmatprep.subr.bf16.mxu0 0
        %693 = vmatpush1.bf16.msra.mxu0 0
        %694 = vmatprep.subr.bf16.mxu0 0
        %695 = vmatpush1.bf16.msra.mxu0 0
        %696 = vmatprep.subr.bf16.mxu0 0
        %697 = vmatpush1.bf16.msra.mxu0 0
        %698 = vmatprep.subr.bf16.mxu0 0
        %699 = vmatpush1.bf16.msra.mxu0 0
        %700 = vmatprep.subr.bf16.mxu0 0
        %701 = vmatpush1.bf16.msra.mxu0 0
        %702 = vmatprep.subr.bf16.mxu0 0
        %703 = vmatpush1.bf16.msra.mxu0 0
        %704 = vmatprep.subr.bf16.mxu0 0
        %705 = vmatpush1.bf16.msra.mxu0 0
        %706 = vmatprep.subr.bf16.mxu0 0
        %707 = vmatpush1.bf16.msra.mxu0 0
        %708 = vmatprep.mubr.bf16.mxu0 0
        %709 = vmatmul.mubr.bf16.gmra.mrb[0].mxu0 %v670
        %v710 = vpop.f32.mrb[0].mxu0
        %v711 = vadd.f32 0.0, %v710
        %v712 = vpop.f32.mrb[0].mxu0
        %v713 = vpop.f32.mrb[0].mxu0
        %v714 = vpop.f32.mrb[0].mxu0
        %715 = vdwg.mxu0
        %716 = vst.msk [vmem:[#allocation3] sm:$0xff] %vm608, %v711
        %s717 = scalar_lea.vmem %s526, 4
        %v718 = vld [vmem:[%s717] sm:$0xf]
        %v719 = vunpack.c.l.bf16 %v718
        %720 = vrot.lane.b32.xlu0 %v605, 120
        %v721 = vpop.permute.xlu0 %720
        %722 = vrot.lane.b32.xlu0 %v605, 88
        %v723 = vpop.permute.xlu0 %722
        %v725 = vsel %vm608, %v721, 0
        %v728 = vsel %vm608, %v723, 0
        %730 = vmatprep.subr.bf16.mxu0 0
        %731 = vmatpush1.bf16.xpose.msra.mxu0 %v728
        %732 = vmatprep.subr.bf16.mxu0 0
        %733 = vmatpush1.bf16.xpose.msra.mxu0 0
        %734 = vmatprep.subr.bf16.mxu0 0
        %735 = vmatpush1.bf16.xpose.msra.mxu0 0
        %736 = vmatprep.subr.bf16.mxu0 0
        %737 = vmatpush1.bf16.xpose.msra.mxu0 0
        %738 = vmatprep.subr.bf16.mxu0 0
        %739 = vmatpush1.bf16.xpose.msra.mxu0 0
        %740 = vmatprep.subr.bf16.mxu0 0
        %741 = vmatpush1.bf16.xpose.msra.mxu0 0
        %742 = vmatprep.subr.bf16.mxu0 0
        %743 = vmatpush1.bf16.xpose.msra.mxu0 0
        %744 = vmatprep.subr.bf16.mxu0 0
        %745 = vmatpush1.bf16.xpose.msra.mxu0 0
        %746 = vmatprep.subr.bf16.mxu0 0
        %747 = vmatpush1.bf16.xpose.msra.mxu0 0
        %748 = vmatprep.subr.bf16.mxu0 0
        %749 = vmatpush1.bf16.xpose.msra.mxu0 0
        %750 = vmatprep.subr.bf16.mxu0 0
        %751 = vmatpush1.bf16.xpose.msra.mxu0 0
        %752 = vmatprep.subr.bf16.mxu0 0
        %753 = vmatpush1.bf16.xpose.msra.mxu0 0
        %754 = vmatprep.subr.bf16.mxu0 0
        %755 = vmatpush1.bf16.xpose.msra.mxu0 0
        %756 = vmatprep.subr.bf16.mxu0 0
        %757 = vmatpush1.bf16.xpose.msra.mxu0 0
        %758 = vmatprep.subr.bf16.mxu0 0
        %759 = vmatpush1.bf16.xpose.msra.mxu0 0
        %760 = vmatprep.subr.bf16.mxu0 0
        %761 = vmatpush1.bf16.xpose.msra.mxu0 0
        %762 = vmatprep.mubr.bf16.mxu0 0
        %763 = vmatmul.mubr.bf16.gmra.mrb[0].mxu0 %v725
        %v764 = vpop.f32.mrb[0].mxu0
        %v765 = vadd.f32 %v719, %v764
        %v766 = vpop.f32.mrb[0].mxu0
        %v767 = vpop.f32.mrb[0].mxu0
        %v768 = vpop.f32.mrb[0].mxu0
        %769 = vdwg.mxu0
        %v770 = vsel %vm608, %v765, -inf
        %771 = vmax.xlane.f32.xlu0 %v770
        %v772 = vpop.xlane.xlu0 %771
        %v773 = vsub.f32 %v765, %v772
        %v774 = vmul.f32 %v773, 1.442695
        %v775 = vpow.pop %v774
        %v776 = vsel %vm608, %v775, 0.0
        %777 = vadd.xlane.f32.xlu0 %v776
        %v778 = vpop.xlane.xlu0 %777
        %v779 = vrcp.pop %v778
        %v780 = vmul.f32 %v775, %v779
        %v781 = vpack.c.bf16 %v780, %v780
        %782 = vrot.lane.b32.xlu0 %v605, 56
        %v783 = vpop.permute.xlu0 %782
        %v785 = vsel %vm608, %v781, 0
        %v788 = vsel %vm672, %v783, 0
        %790 = vmatprep.subr.bf16.mxu0 0
        %791 = vmatpush1.bf16.msra.mxu0 %v788
        %792 = vmatprep.subr.bf16.mxu0 0
        %793 = vmatpush1.bf16.msra.mxu0 0
        %794 = vmatprep.subr.bf16.mxu0 0
        %795 = vmatpush1.bf16.msra.mxu0 0
        %796 = vmatprep.subr.bf16.mxu0 0
        %797 = vmatpush1.bf16.msra.mxu0 0
        %798 = vmatprep.subr.bf16.mxu0 0
        %799 = vmatpush1.bf16.msra.mxu0 0
        %800 = vmatprep.subr.bf16.mxu0 0
        %801 = vmatpush1.bf16.msra.mxu0 0
        %802 = vmatprep.subr.bf16.mxu0 0
        %803 = vmatpush1.bf16.msra.mxu0 0
        %804 = vmatprep.subr.bf16.mxu0 0
        %805 = vmatpush1.bf16.msra.mxu0 0
        %806 = vmatprep.subr.bf16.mxu0 0
        %807 = vmatpush1.bf16.msra.mxu0 0
        %808 = vmatprep.subr.bf16.mxu0 0
        %809 = vmatpush1.bf16.msra.mxu0 0
        %810 = vmatprep.subr.bf16.mxu0 0
        %811 = vmatpush1.bf16.msra.mxu0 0
        %812 = vmatprep.subr.bf16.mxu0 0
        %813 = vmatpush1.bf16.msra.mxu0 0
        %814 = vmatprep.subr.bf16.mxu0 0
        %815 = vmatpush1.bf16.msra.mxu0 0
        %816 = vmatprep.subr.bf16.mxu0 0
        %817 = vmatpush1.bf16.msra.mxu0 0
        %818 = vmatprep.subr.bf16.mxu0 0
        %819 = vmatpush1.bf16.msra.mxu0 0
        %820 = vmatprep.subr.bf16.mxu0 0
        %821 = vmatpush1.bf16.msra.mxu0 0
        %822 = vmatprep.mubr.bf16.mxu0 0
        %823 = vmatmul.mubr.bf16.gmra.mrb[0].mxu0 %v785
        %v824 = vpop.f32.mrb[0].mxu0
        %v825 = vadd.f32 0.0, %v824
        %v826 = vpop.f32.mrb[0].mxu0
        %v827 = vpop.f32.mrb[0].mxu0
        %v828 = vpop.f32.mrb[0].mxu0
        %829 = vdwg.mxu0
        %831 = vrot.lane.b32.xlu0 %v825, 8
        %v832 = vpop.permute.xlu0 %831
        %vm834 = vcmask 130112
        %835 = vst.msk [vmem:[#allocation3] sm:$0xff] %vm834, %v832
        %s836 = scalar_lea.vmem %s526, 8
        %v837 = vld [vmem:[%s836] sm:$0xf]
        %v838 = vunpack.c.l.bf16 %v837
        %839 = vrot.lane.b32.xlu0 %v605, 112
        %v840 = vpop.permute.xlu0 %839
        %841 = vrot.lane.b32.xlu0 %v605, 80
        %v842 = vpop.permute.xlu0 %841
        %v844 = vsel %vm608, %v840, 0
        %v847 = vsel %vm608, %v842, 0
        %849 = vmatprep.subr.bf16.mxu0 0
        %850 = vmatpush1.bf16.xpose.msra.mxu0 %v847
        %851 = vmatprep.subr.bf16.mxu0 0
        %852 = vmatpush1.bf16.xpose.msra.mxu0 0
        %853 = vmatprep.subr.bf16.mxu0 0
        %854 = vmatpush1.bf16.xpose.msra.mxu0 0
        %855 = vmatprep.subr.bf16.mxu0 0
        %856 = vmatpush1.bf16.xpose.msra.mxu0 0
        %857 = vmatprep.subr.bf16.mxu0 0
        %858 = vmatpush1.bf16.xpose.msra.mxu0 0
        %859 = vmatprep.subr.bf16.mxu0 0
        %860 = vmatpush1.bf16.xpose.msra.mxu0 0
        %861 = vmatprep.subr.bf16.mxu0 0
        %862 = vmatpush1.bf16.xpose.msra.mxu0 0
        %863 = vmatprep.subr.bf16.mxu0 0
        %864 = vmatpush1.bf16.xpose.msra.mxu0 0
        %865 = vmatprep.subr.bf16.mxu0 0
        %866 = vmatpush1.bf16.xpose.msra.mxu0 0
        %867 = vmatprep.subr.bf16.mxu0 0
        %868 = vmatpush1.bf16.xpose.msra.mxu0 0
        %869 = vmatprep.subr.bf16.mxu0 0
        %870 = vmatpush1.bf16.xpose.msra.mxu0 0
        %871 = vmatprep.subr.bf16.mxu0 0
        %872 = vmatpush1.bf16.xpose.msra.mxu0 0
        %873 = vmatprep.subr.bf16.mxu0 0
        %874 = vmatpush1.bf16.xpose.msra.mxu0 0
        %875 = vmatprep.subr.bf16.mxu0 0
        %876 = vmatpush1.bf16.xpose.msra.mxu0 0
        %877 = vmatprep.subr.bf16.mxu0 0
        %878 = vmatpush1.bf16.xpose.msra.mxu0 0
        %879 = vmatprep.subr.bf16.mxu0 0
        %880 = vmatpush1.bf16.xpose.msra.mxu0 0
        %881 = vmatprep.mubr.bf16.mxu0 0
        %882 = vmatmul.mubr.bf16.gmra.mrb[0].mxu0 %v844
        %v883 = vpop.f32.mrb[0].mxu0
        %v884 = vadd.f32 %v838, %v883
        %v885 = vpop.f32.mrb[0].mxu0
        %v886 = vpop.f32.mrb[0].mxu0
        %v887 = vpop.f32.mrb[0].mxu0
        %888 = vdwg.mxu0
        %v889 = vsel %vm608, %v884, -inf
        %890 = vmax.xlane.f32.xlu0 %v889
        %v891 = vpop.xlane.xlu0 %890
        %v892 = vsub.f32 %v884, %v891
        %v893 = vmul.f32 %v892, 1.442695
        %v894 = vpow.pop %v893
        %v895 = vsel %vm608, %v894, 0.0
        %896 = vadd.xlane.f32.xlu0 %v895
        %v897 = vpop.xlane.xlu0 %896
        %v898 = vrcp.pop %v897
        %v899 = vmul.f32 %v894, %v898
        %v900 = vpack.c.bf16 %v899, %v899
        %901 = vrot.lane.b32.xlu0 %v605, 48
        %v902 = vpop.permute.xlu0 %901
        %v904 = vsel %vm608, %v900, 0
        %v907 = vsel %vm672, %v902, 0
        %909 = vmatprep.subr.bf16.mxu0 0
        %910 = vmatpush1.bf16.msra.mxu0 %v907
        %911 = vmatprep.subr.bf16.mxu0 0
        %912 = vmatpush1.bf16.msra.mxu0 0
        %913 = vmatprep.subr.bf16.mxu0 0
        %914 = vmatpush1.bf16.msra.mxu0 0
        %915 = vmatprep.subr.bf16.mxu0 0
        %916 = vmatpush1.bf16.msra.mxu0 0
        %917 = vmatprep.subr.bf16.mxu0 0
        %918 = vmatpush1.bf16.msra.mxu0 0
        %919 = vmatprep.subr.bf16.mxu0 0
        %920 = vmatpush1.bf16.msra.mxu0 0
        %921 = vmatprep.subr.bf16.mxu0 0
        %922 = vmatpush1.bf16.msra.mxu0 0
        %923 = vmatprep.subr.bf16.mxu0 0
        %924 = vmatpush1.bf16.msra.mxu0 0
        %925 = vmatprep.subr.bf16.mxu0 0
        %926 = vmatpush1.bf16.msra.mxu0 0
        %927 = vmatprep.subr.bf16.mxu0 0
        %928 = vmatpush1.bf16.msra.mxu0 0
        %929 = vmatprep.subr.bf16.mxu0 0
        %930 = vmatpush1.bf16.msra.mxu0 0
        %931 = vmatprep.subr.bf16.mxu0 0
        %932 = vmatpush1.bf16.msra.mxu0 0
        %933 = vmatprep.subr.bf16.mxu0 0
        %934 = vmatpush1.bf16.msra.mxu0 0
        %935 = vmatprep.subr.bf16.mxu0 0
        %936 = vmatpush1.bf16.msra.mxu0 0
        %937 = vmatprep.subr.bf16.mxu0 0
        %938 = vmatpush1.bf16.msra.mxu0 0
        %939 = vmatprep.subr.bf16.mxu0 0
        %940 = vmatpush1.bf16.msra.mxu0 0
        %941 = vmatprep.mubr.bf16.mxu0 0
        %942 = vmatmul.mubr.bf16.gmra.mrb[0].mxu0 %v904
        %v943 = vpop.f32.mrb[0].mxu0
        %v944 = vadd.f32 0.0, %v943
        %v945 = vpop.f32.mrb[0].mxu0
        %v946 = vpop.f32.mrb[0].mxu0
        %v947 = vpop.f32.mrb[0].mxu0
        %948 = vdwg.mxu0
        %950 = vrot.lane.b32.xlu0 %v944, 16
        %v951 = vpop.permute.xlu0 %950
        %vm953 = vcmask 195712
        %954 = vst.msk [vmem:[#allocation3] sm:$0xff] %vm953, %v951
        %s955 = scalar_lea.vmem %s526, 12
        %v956 = vld [vmem:[%s955] sm:$0xf]
        %v957 = vunpack.c.l.bf16 %v956
        %958 = vrot.lane.b32.xlu0 %v605, 104
        %v959 = vpop.permute.xlu0 %958
        %960 = vrot.lane.b32.xlu0 %v605, 72
        %v961 = vpop.permute.xlu0 %960
        %v963 = vsel %vm608, %v959, 0
        %v966 = vsel %vm608, %v961, 0
        %968 = vmatprep.subr.bf16.mxu0 0
        %969 = vmatpush1.bf16.xpose.msra.mxu0 %v966
        %970 = vmatprep.subr.bf16.mxu0 0
        %971 = vmatpush1.bf16.xpose.msra.mxu0 0
        %972 = vmatprep.subr.bf16.mxu0 0
        %973 = vmatpush1.bf16.xpose.msra.mxu0 0
        %974 = vmatprep.subr.bf16.mxu0 0
        %975 = vmatpush1.bf16.xpose.msra.mxu0 0
        %976 = vmatprep.subr.bf16.mxu0 0
        %977 = vmatpush1.bf16.xpose.msra.mxu0 0
        %978 = vmatprep.subr.bf16.mxu0 0
        %979 = vmatpush1.bf16.xpose.msra.mxu0 0
        %980 = vmatprep.subr.bf16.mxu0 0
        %981 = vmatpush1.bf16.xpose.msra.mxu0 0
        %982 = vmatprep.subr.bf16.mxu0 0
        %983 = vmatpush1.bf16.xpose.msra.mxu0 0
        %984 = vmatprep.subr.bf16.mxu0 0
        %985 = vmatpush1.bf16.xpose.msra.mxu0 0
        %986 = vmatprep.subr.bf16.mxu0 0
        %987 = vmatpush1.bf16.xpose.msra.mxu0 0
        %988 = vmatprep.subr.bf16.mxu0 0
        %989 = vmatpush1.bf16.xpose.msra.mxu0 0
        %990 = vmatprep.subr.bf16.mxu0 0
        %991 = vmatpush1.bf16.xpose.msra.mxu0 0
        %992 = vmatprep.subr.bf16.mxu0 0
        %993 = vmatpush1.bf16.xpose.msra.mxu0 0
        %994 = vmatprep.subr.bf16.mxu0 0
        %995 = vmatpush1.bf16.xpose.msra.mxu0 0
        %996 = vmatprep.subr.bf16.mxu0 0
        %997 = vmatpush1.bf16.xpose.msra.mxu0 0
        %998 = vmatprep.subr.bf16.mxu0 0
        %999 = vmatpush1.bf16.xpose.msra.mxu0 0
        %1000 = vmatprep.mubr.bf16.mxu0 0
        %1001 = vmatmul.mubr.bf16.gmra.mrb[0].mxu0 %v963
        %v1002 = vpop.f32.mrb[0].mxu0
        %v1003 = vadd.f32 %v957, %v1002
        %v1004 = vpop.f32.mrb[0].mxu0
        %v1005 = vpop.f32.mrb[0].mxu0
        %v1006 = vpop.f32.mrb[0].mxu0
        %1007 = vdwg.mxu0
        %v1008 = vsel %vm608, %v1003, -inf
        %1009 = vmax.xlane.f32.xlu0 %v1008
        %v1010 = vpop.xlane.xlu0 %1009
        %v1011 = vsub.f32 %v1003, %v1010
        %v1012 = vmul.f32 %v1011, 1.442695
        %v1013 = vpow.pop %v1012
        %v1014 = vsel %vm608, %v1013, 0.0
        %1015 = vadd.xlane.f32.xlu0 %v1014
        %v1016 = vpop.xlane.xlu0 %1015
        %v1017 = vrcp.pop %v1016
        %v1018 = vmul.f32 %v1013, %v1017
        %v1019 = vpack.c.bf16 %v1018, %v1018
        %1020 = vrot.lane.b32.xlu0 %v605, 40
        %v1021 = vpop.permute.xlu0 %1020
        %v1023 = vsel %vm608, %v1019, 0
        %v1026 = vsel %vm672, %v1021, 0
        %1028 = vmatprep.subr.bf16.mxu0 0
        %1029 = vmatpush1.bf16.msra.mxu0 %v1026
        %1030 = vmatprep.subr.bf16.mxu0 0
        %1031 = vmatpush1.bf16.msra.mxu0 0
        %1032 = vmatprep.subr.bf16.mxu0 0
        %1033 = vmatpush1.bf16.msra.mxu0 0
        %1034 = vmatprep.subr.bf16.mxu0 0
        %1035 = vmatpush1.bf16.msra.mxu0 0
        %1036 = vmatprep.subr.bf16.mxu0 0
        %1037 = vmatpush1.bf16.msra.mxu0 0
        %1038 = vmatprep.subr.bf16.mxu0 0
        %1039 = vmatpush1.bf16.msra.mxu0 0
        %1040 = vmatprep.subr.bf16.mxu0 0
        %1041 = vmatpush1.bf16.msra.mxu0 0
        %1042 = vmatprep.subr.bf16.mxu0 0
        %1043 = vmatpush1.bf16.msra.mxu0 0
        %1044 = vmatprep.subr.bf16.mxu0 0
        %1045 = vmatpush1.bf16.msra.mxu0 0
        %1046 = vmatprep.subr.bf16.mxu0 0
        %1047 = vmatpush1.bf16.msra.mxu0 0
        %1048 = vmatprep.subr.bf16.mxu0 0
        %1049 = vmatpush1.bf16.msra.mxu0 0
        %1050 = vmatprep.subr.bf16.mxu0 0
        %1051 = vmatpush1.bf16.msra.mxu0 0
        %1052 = vmatprep.subr.bf16.mxu0 0
        %1053 = vmatpush1.bf16.msra.mxu0 0
        %1054 = vmatprep.subr.bf16.mxu0 0
        %1055 = vmatpush1.bf16.msra.mxu0 0
        %1056 = vmatprep.subr.bf16.mxu0 0
        %1057 = vmatpush1.bf16.msra.mxu0 0
        %1058 = vmatprep.subr.bf16.mxu0 0
        %1059 = vmatpush1.bf16.msra.mxu0 0
        %1060 = vmatprep.mubr.bf16.mxu0 0
        %1061 = vmatmul.mubr.bf16.gmra.mrb[0].mxu0 %v1023
        %v1062 = vpop.f32.mrb[0].mxu0
        %v1063 = vadd.f32 0.0, %v1062
        %v1064 = vpop.f32.mrb[0].mxu0
        %v1065 = vpop.f32.mrb[0].mxu0
        %v1066 = vpop.f32.mrb[0].mxu0
        %1067 = vdwg.mxu0
        %1069 = vrot.lane.b32.xlu0 %v1063, 24
        %v1070 = vpop.permute.xlu0 %1069
        %vm1072 = vcmask 261312
        %1073 = vst.msk [vmem:[#allocation3] sm:$0xff] %vm1072, %v1070
        %v1074 = vld [vmem:[#allocation3] sm:$0xff]
        %v1075 = vpack.c.bf16 %v1074, %v1074
        %v1076 = vld [vmem:[#allocation7] sm:$0xf]
        %v1077 = vld [vmem:[#allocation7 + $0x4] sm:$0xf]
        %v1078 = vld [vmem:[#allocation7 + $0x8] sm:$0xf]
        %v1079 = vld [vmem:[#allocation7 + $0xc] sm:$0xf]
        %v1080 = vld [vmem:[%s5] sm:$0x1]
        %v1082 = vlaneseq
        %v1083 = vshrl.u32 %v1082, 7
        %v1084 = vsub.s32 0, %v1083
        %v1085 = vrot.slane %v1080, %v1084
        %v1091 = vunpack.c.l.b16 %v1076
        %v1092 = vunpack.c.l.b16 %v1077
        %v1093 = vunpack.c.l.b16 %v1078
        %v1094 = vunpack.c.l.b16 %v1079
        %v1095 = vpack.c.b16 %v1092, %v1091
        %v1096 = vpack.c.b16 %v1094, %v1093
        %v1100 = vsel %vm553, %v1075, 0
        %1102 = vmatprep.subr.bf16.mxu0 0
        %1103 = vmatpush1.bf16.msra.mxu0 %v1095
        %1104 = vmatprep.subr.bf16.mxu0 0
        %1105 = vmatpush1.bf16.msra.mxu0 %v1096
        %1106 = vmatprep.subr.bf16.mxu0 0
        %1107 = vmatpush1.bf16.msra.mxu0 0
        %1108 = vmatprep.subr.bf16.mxu0 0
        %1109 = vmatpush1.bf16.msra.mxu0 0
        %1110 = vmatprep.subr.bf16.mxu0 0
        %1111 = vmatpush1.bf16.msra.mxu0 0
        %1112 = vmatprep.subr.bf16.mxu0 0
        %1113 = vmatpush1.bf16.msra.mxu0 0
        %1114 = vmatprep.subr.bf16.mxu0 0
        %1115 = vmatpush1.bf16.msra.mxu0 0
        %1116 = vmatprep.subr.bf16.mxu0 0
        %1117 = vmatpush1.bf16.msra.mxu0 0
        %1118 = vmatprep.subr.bf16.mxu0 0
        %1119 = vmatpush1.bf16.msra.mxu0 0
        %1120 = vmatprep.subr.bf16.mxu0 0
        %1121 = vmatpush1.bf16.msra.mxu0 0
        %1122 = vmatprep.subr.bf16.mxu0 0
        %1123 = vmatpush1.bf16.msra.mxu0 0
        %1124 = vmatprep.subr.bf16.mxu0 0
        %1125 = vmatpush1.bf16.msra.mxu0 0
        %1126 = vmatprep.subr.bf16.mxu0 0
        %1127 = vmatpush1.bf16.msra.mxu0 0
        %1128 = vmatprep.subr.bf16.mxu0 0
        %1129 = vmatpush1.bf16.msra.mxu0 0
        %1130 = vmatprep.subr.bf16.mxu0 0
        %1131 = vmatpush1.bf16.msra.mxu0 0
        %1132 = vmatprep.subr.bf16.mxu0 0
        %1133 = vmatpush1.bf16.msra.mxu0 0
        %1134 = vmatprep.mubr.bf16.mxu0 0
        %1135 = vmatmul.mubr.bf16.gmra.mrb[0].mxu0 %v1100
        %v1136 = vpop.f32.mrb[0].mxu0
        %v1137 = vadd.f32 %v1085, %v1136
        %v1138 = vpop.f32.mrb[0].mxu0
        %v1139 = vpop.f32.mrb[0].mxu0
        %v1140 = vpop.f32.mrb[0].mxu0
        %1141 = vdwg.mxu0
        %v1142 = vadd.f32 %v528, %v1137
        %v1143 = vsel %vm553, %v1142, 0.0
        %1144 = vadd.xlane.f32.xlu0 %v1143
        %v1145 = vpop.xlane.xlu0 %1144
        %v1146 = vrcp.pop 32.0
        %v1147 = vmul.f32 %v1145, %v1146
        %v1148 = vsub.f32 %v1142, %v1147
        %v1149 = vmul.f32 %v1148, %v1148
        %v1150 = vsel %vm553, %v1149, 0.0
        %1151 = vadd.xlane.f32.xlu0 %v1150
        %v1152 = vpop.xlane.xlu0 %1151
        %v1153 = vmul.f32 %v1152, %v1146
        %v1154 = vadd.f32 %v1153, 1e-05
        %v1155 = vrsqrt.pop %v1154
        %v1156 = vmul.f32 %v1148, %v1155
        %v1157 = vld [vmem:[%s6] sm:$0x1]
        %v1159 = vlaneseq
        %v1160 = vshrl.u32 %v1159, 7
        %v1161 = vsub.s32 0, %v1160
        %v1162 = vrot.slane %v1157, %v1161
        %v1164 = vmul.f32 %v1156, %v1162
        %v1165 = vld [vmem:[%s7] sm:$0x1]
        %v1167 = vlaneseq
        %v1168 = vshrl.u32 %v1167, 7
        %v1169 = vsub.s32 0, %v1168
        %v1170 = vrot.slane %v1165, %v1169
        %v1172 = vadd.f32 %v1164, %v1170
        %v1173 = vpack.c.bf16 %v1172, %v1172
        %v1174 = vld [vmem:[#allocation9] sm:$0xf]
        %v1175 = vld [vmem:[#allocation9 + $0x4] sm:$0xf]
        %v1176 = vld [vmem:[#allocation9 + $0x8] sm:$0xf]
        %v1177 = vld [vmem:[#allocation9 + $0xc] sm:$0xf]
        %v1178 = vld [vmem:[%s9] sm:$0x1]
        %v1180 = vlaneseq
        %v1181 = vshrl.u32 %v1180, 7
        %v1182 = vsub.s32 0, %v1181
        %v1183 = vrot.slane %v1178, %v1182
        %v1189 = vunpack.c.l.b16 %v1174
        %v1190 = vunpack.c.l.b16 %v1175
        %v1191 = vunpack.c.l.b16 %v1176
        %v1192 = vunpack.c.l.b16 %v1177
        %v1193 = vpack.c.b16 %v1190, %v1189
        %v1194 = vpack.c.b16 %v1192, %v1191
        %v1198 = vsel %vm553, %v1173, 0
        %1200 = vmatprep.subr.bf16.mxu0 0
        %1201 = vmatpush1.bf16.msra.mxu0 %v1193
        %1202 = vmatprep.subr.bf16.mxu0 0
        %1203 = vmatpush1.bf16.msra.mxu0 %v1194
        %1204 = vmatprep.subr.bf16.mxu0 0
        %1205 = vmatpush1.bf16.msra.mxu0 0
        %1206 = vmatprep.subr.bf16.mxu0 0
        %1207 = vmatpush1.bf16.msra.mxu0 0
        %1208 = vmatprep.subr.bf16.mxu0 0
        %1209 = vmatpush1.bf16.msra.mxu0 0
        %1210 = vmatprep.subr.bf16.mxu0 0
        %1211 = vmatpush1.bf16.msra.mxu0 0
        %1212 = vmatprep.subr.bf16.mxu0 0
        %1213 = vmatpush1.bf16.msra.mxu0 0
        %1214 = vmatprep.subr.bf16.mxu0 0
        %1215 = vmatpush1.bf16.msra.mxu0 0
        %1216 = vmatprep.subr.bf16.mxu0 0
        %1217 = vmatpush1.bf16.msra.mxu0 0
        %1218 = vmatprep.subr.bf16.mxu0 0
        %1219 = vmatpush1.bf16.msra.mxu0 0
        %1220 = vmatprep.subr.bf16.mxu0 0
        %1221 = vmatpush1.bf16.msra.mxu0 0
        %1222 = vmatprep.subr.bf16.mxu0 0
        %1223 = vmatpush1.bf16.msra.mxu0 0
        %1224 = vmatprep.subr.bf16.mxu0 0
        %1225 = vmatpush1.bf16.msra.mxu0 0
        %1226 = vmatprep.subr.bf16.mxu0 0
        %1227 = vmatpush1.bf16.msra.mxu0 0
        %1228 = vmatprep.subr.bf16.mxu0 0
        %1229 = vmatpush1.bf16.msra.mxu0 0
        %1230 = vmatprep.subr.bf16.mxu0 0
        %1231 = vmatpush1.bf16.msra.mxu0 0
        %1232 = vmatprep.mubr.bf16.mxu0 0
        %1233 = vmatmul.mubr.bf16.gmra.mrb[0].mxu0 %v1198
        %v1234 = vpop.f32.mrb[0].mxu0
        %v1235 = vadd.f32 %v1183, %v1234
        %v1236 = vpop.f32.mrb[0].mxu0
        %v1237 = vpop.f32.mrb[0].mxu0
        %v1238 = vpop.f32.mrb[0].mxu0
        %1239 = vdwg.mxu0
        %v1240 = vmax.f32 %v1235, 0.0
        %v1241 = vpack.c.bf16 %v1240, %v1240
        %v1242 = vld [vmem:[%s10] sm:$0xf]
        %v1243 = vld [vmem:[%s10 + $0x4] sm:$0xf]
        %v1244 = vld [vmem:[%s10 + $0x8] sm:$0xf]
        %v1245 = vld [vmem:[%s10 + $0xc] sm:$0xf]
        %v1246 = vld [vmem:[%s10 + $0x10] sm:$0xf]
        %v1247 = vld [vmem:[%s10 + $0x14] sm:$0xf]
        %v1248 = vld [vmem:[%s10 + $0x18] sm:$0xf]
        %v1249 = vld [vmem:[%s10 + $0x1c] sm:$0xf]
        %v1250 = vld [vmem:[%s11] sm:$0x1]
        %v1252 = vlaneseq
        %v1253 = vshrl.u32 %v1252, 7
        %v1254 = vsub.s32 0, %v1253
        %v1255 = vrot.slane %v1250, %v1254
        %v1265 = vunpack.c.l.b16 %v1242
        %v1266 = vunpack.c.l.b16 %v1243
        %v1267 = vunpack.c.l.b16 %v1244
        %v1268 = vunpack.c.l.b16 %v1245
        %v1269 = vunpack.c.l.b16 %v1246
        %v1270 = vunpack.c.l.b16 %v1247
        %v1271 = vunpack.c.l.b16 %v1248
        %v1272 = vunpack.c.l.b16 %v1249
        %v1273 = vpack.c.b16 %v1266, %v1265
        %v1274 = vpack.c.b16 %v1268, %v1267
        %v1275 = vpack.c.b16 %v1270, %v1269
        %v1276 = vpack.c.b16 %v1272, %v1271
        %vm1281 = vcmask 523264
        %v1283 = vsel %vm1281, %v1241, 0
        %1285 = vmatprep.subr.bf16.mxu0 0
        %1286 = vmatpush1.bf16.msra.mxu0 %v1273
        %1287 = vmatprep.subr.bf16.mxu0 0
        %1288 = vmatpush1.bf16.msra.mxu0 %v1274
        %1289 = vmatprep.subr.bf16.mxu0 0
        %1290 = vmatpush1.bf16.msra.mxu0 %v1275
        %1291 = vmatprep.subr.bf16.mxu0 0
        %1292 = vmatpush1.bf16.msra.mxu0 %v1276
        %1293 = vmatprep.subr.bf16.mxu0 0
        %1294 = vmatpush1.bf16.msra.mxu0 0
        %1295 = vmatprep.subr.bf16.mxu0 0
        %1296 = vmatpush1.bf16.msra.mxu0 0
        %1297 = vmatprep.subr.bf16.mxu0 0
        %1298 = vmatpush1.bf16.msra.mxu0 0
        %1299 = vmatprep.subr.bf16.mxu0 0
        %1300 = vmatpush1.bf16.msra.mxu0 0
        %1301 = vmatprep.subr.bf16.mxu0 0
        %1302 = vmatpush1.bf16.msra.mxu0 0
        %1303 = vmatprep.subr.bf16.mxu0 0
        %1304 = vmatpush1.bf16.msra.mxu0 0
        %1305 = vmatprep.subr.bf16.mxu0 0
        %1306 = vmatpush1.bf16.msra.mxu0 0
        %1307 = vmatprep.subr.bf16.mxu0 0
        %1308 = vmatpush1.bf16.msra.mxu0 0
        %1309 = vmatprep.subr.bf16.mxu0 0
        %1310 = vmatpush1.bf16.msra.mxu0 0
        %1311 = vmatprep.subr.bf16.mxu0 0
        %1312 = vmatpush1.bf16.msra.mxu0 0
        %1313 = vmatprep.subr.bf16.mxu0 0
        %1314 = vmatpush1.bf16.msra.mxu0 0
        %1315 = vmatprep.subr.bf16.mxu0 0
        %1316 = vmatpush1.bf16.msra.mxu0 0
        %1317 = vmatprep.mubr.bf16.mxu0 0
        %1318 = vmatmul.mubr.bf16.gmra.mrb[0].mxu0 %v1283
        %v1319 = vpop.f32.mrb[0].mxu0
        %v1320 = vadd.f32 %v1255, %v1319
        %v1321 = vpop.f32.mrb[0].mxu0
        %v1322 = vpop.f32.mrb[0].mxu0
        %v1323 = vpop.f32.mrb[0].mxu0
        %1324 = vdwg.mxu0
        %v1325 = vadd.f32 %v1172, %v1320
        %v1326 = vsel %vm553, %v1325, 0.0
        %1327 = vadd.xlane.f32.xlu0 %v1326
        %v1328 = vpop.xlane.xlu0 %1327
        %v1329 = vmul.f32 %v1328, %v1146
        %v1330 = vsub.f32 %v1325, %v1329
        %v1331 = vmul.f32 %v1330, %v1330
        %v1332 = vsel %vm553, %v1331, 0.0
        %1333 = vadd.xlane.f32.xlu0 %v1332
        %v1334 = vpop.xlane.xlu0 %1333
        %v1335 = vmul.f32 %v1334, %v1146
        %v1336 = vadd.f32 %v1335, 1e-05
        %v1337 = vrsqrt.pop %v1336
        %v1338 = vmul.f32 %v1330, %v1337
        %v1339 = vld [vmem:[%s12] sm:$0x1]
        %v1341 = vlaneseq
        %v1342 = vshrl.u32 %v1341, 7
        %v1343 = vsub.s32 0, %v1342
        %v1344 = vrot.slane %v1339, %v1343
        %v1346 = vmul.f32 %v1338, %v1344
        %v1347 = vld [vmem:[%s13] sm:$0x1]
        %v1349 = vlaneseq
        %v1350 = vshrl.u32 %v1349, 7
        %v1351 = vsub.s32 0, %v1350
        %v1352 = vrot.slane %v1347, %v1351
        %v1354 = vadd.f32 %v1346, %v1352
        %1355 = vst.msk [vmem:[%s517] sm:$0xff] %vm553, %v1354
        %s1356 = sand.u32 %s342, 1
        %s1357 = scalar_lea.sflag [#allocation6], %s1356
        %s1358 = sand.u32 %s342, 1
        %s1359 = smul.addr %s1358, 8
        %s1360 = scalar_lea.vmem [#allocation10], %s1359
        // Predicated region
        $region89: #{tpu_custom_call.1} parent=75 // pred_check
          %p1361 = pneg %p352
        $region90: #{tpu_custom_call.1} parent=75 // pred_check_branch
          %1363 = sbr.rel (%p1361) target = $region92
        $region91: #{tpu_custom_call.1} parent=75 // pred_region
          %s1365 = ssub.s32 128, 128
          %1366 = vsyncadd %s1357, %s1365
          %s1367 = smul.addr %s30, 128
          %s1368 = scalar_lea.hbm %s14, %s1367
          %s1370 = sshll.u32 %s1360, 4
          %s1371 = int_to_ptr.vmem [resolvable:$true] %s1370
          %1373 = dma.vmem_to_hbm [thread:$0]  %s1371, 128, %s1368, %s1357
        $region92: #{tpu_custom_call.1} parent=75 // pred_fallthru
          _
      $region76: #{tpu_custom_call.1} parent=5 // pred_fallthru
        _
      %p1374 = scmp.le.s32.totalorder 2, %s25
      // Predicated region
      $region93: #{tpu_custom_call.1} parent=5 // pred_check
        %p1375 = pneg %p1374
      $region94: #{tpu_custom_call.1} parent=5 // pred_check_branch
        %1377 = sbr.rel (%p1375) target = $region96
      $region95: #{tpu_custom_call.1} parent=5 // pred_region
        %s1378 = ssub.s32 %s25, 2
        // Predicated region
        $region97: #{tpu_custom_call.1} parent=95 // pred_check
          %p1379 = pneg %p358
        $region98: #{tpu_custom_call.1} parent=95 // pred_check_branch
          %1381 = sbr.rel (%p1379) target = $region100
        $region99: #{tpu_custom_call.1} parent=95 // pred_region
          %s1382 = sand.u32 %s343, 1
          %s1383 = scalar_lea.sflag [#allocation6], %s1382
          %s1384 = sand.u32 %s343, 1
          %s1385 = smul.addr %s1384, 8
          %s1386 = scalar_lea.vmem [#allocation10], %s1385
          %1387 = dma.done %s1383, 128
        $region100: #{tpu_custom_call.1} parent=95 // pred_fallthru
          _
      $region96: #{tpu_custom_call.1} parent=5 // pred_fallthru
        _
    $region6: #{tpu_custom_call.1} parent=1 // loop_footer
      %s29 = sadd.s32 1, %s25
    $region7: #{tpu_custom_call.1} parent=1 // loop_footer_branch
      %24 = sbr.rel target = $region3
    $region8: #{tpu_custom_call.1} parent=1 // loop_exit
      _
    %1388 = vsyncpa [#allocation5], 1
    %s1389 = scalar_lea.sflag [#allocation5], 1
    %1390 = vsyncpa %s1389, 1
    %1391 = vsyncpa [#allocation8], 1
    %1392 = vsyncpa [#allocation6], 1
    %s1393 = scalar_lea.sflag [#allocation6], 1
    %1394 = vsyncpa %s1393, 1

</llo_original>
